<compile_context>
chip_gen: v7x
topology: tpu7x:2x2x1
jax: 0.10.0
libtpu: 0.0.40
codegen_flags: <defaults>
</compile_context>

<pallas_src>
import functools

import jax
import jax.numpy as jnp
from jax.experimental import pallas as pl
from jax.experimental.pallas import tpu as pltpu


def _round_up(v: int, m: int) -> int:
    return (v + m - 1) // m * m


def _pick_tile(n_pad: int, cap: int) -> int:
    """Largest tile from {512,384,256,128} that divides n_pad and is <= cap."""
    for t in (512, 384, 256, 128):
        if t <= cap and n_pad % t == 0:
            return t
    return 128


# ---------------------------------------------------------------------------
# Kernel 1: d = rsqrt(clamp(deg, 1)) from int8 adjacency, tiled on both axes.
# ---------------------------------------------------------------------------
def _deg_kernel(adj_ref, d_ref, acc_ref):
    k = pl.program_id(1)

    @pl.when(k == 0)
    def _init():
        acc_ref[...] = jnp.zeros_like(acc_ref)

    acc_ref[...] += jnp.sum(adj_ref[...].astype(jnp.float32), axis=-1,
                            keepdims=True)

    @pl.when(k == pl.num_programs(1) - 1)
    def _finalize():
        # clamp(min=1) BEFORE rsqrt so isolated / padded nodes don't give inf.
        d_ref[...] = jax.lax.rsqrt(jnp.maximum(acc_ref[...], 1.0))


def deg_inv_sqrt(adj_i8, *, tile_i, tile_k):
    n_pad = adj_i8.shape[0]
    return pl.pallas_call(
        _deg_kernel,
        out_shape=jax.ShapeDtypeStruct((n_pad, 1), jnp.float32),
        grid=(n_pad // tile_i, n_pad // tile_k),
        in_specs=[pl.BlockSpec((tile_i, tile_k), lambda i, k: (i, k))],
        out_specs=pl.BlockSpec((tile_i, 1), lambda i, k: (i, 0)),
        scratch_shapes=[pltpu.VMEM((tile_i, 1), jnp.float32)],
        compiler_params=pltpu.CompilerParams(
            dimension_semantics=("parallel", "arbitrary")),
    )(adj_i8)


# ---------------------------------------------------------------------------
# Kernel 2: H = (d ⊙ X) @ W, computed once per layer, bf16 output.
# ---------------------------------------------------------------------------
def _xw_kernel(x_ref, d_ref, w_ref, h_ref):
    xd = x_ref[...].astype(jnp.float32) * d_ref[...]          # f32 VPU scale
    h_ref[...] = jnp.dot(xd.astype(jnp.bfloat16), w_ref[...],  # bf16 MXU feed
                         preferred_element_type=jnp.float32
                         ).astype(h_ref.dtype)


def scaled_xw(x, d, w_bf16, *, tile_m):
    n_pad, f_in_p = x.shape
    f_out_p = w_bf16.shape[1]
    return pl.pallas_call(
        _xw_kernel,
        out_shape=jax.ShapeDtypeStruct((n_pad, f_out_p), jnp.bfloat16),
        grid=(n_pad // tile_m,),
        in_specs=[
            pl.BlockSpec((tile_m, f_in_p), lambda m: (m, 0)),   # X tile
            pl.BlockSpec((tile_m, 1), lambda m: (m, 0)),        # d tile
            pl.BlockSpec((f_in_p, f_out_p), lambda m: (0, 0)),  # W (resident)
        ],
        out_specs=pl.BlockSpec((tile_m, f_out_p), lambda m: (m, 0)),
        compiler_params=pltpu.CompilerParams(
            dimension_semantics=("parallel",)),
    )(x, d, w_bf16)


# ---------------------------------------------------------------------------
# Kernel 3: out[i] = relu( d_i * sum_k A[i,k] @ H[k] + b ), bf16 output.
# H is VMEM-resident (constant-index BlockSpec); A streams as int8 tiles and
# is upcast to bf16 on the VPU just before the MXU dot.
# ---------------------------------------------------------------------------
def _agg_kernel(a_ref, h_ref, b_ref, drow_ref, o_ref, acc_ref, *, tile_k):
    k = pl.program_id(1)

    @pl.when(k == 0)
    def _init():
        acc_ref[...] = jnp.zeros_like(acc_ref)

    ks = pl.multiple_of(k * tile_k, tile_k)
    a_bf16 = a_ref[...].astype(jnp.float32).astype(jnp.bfloat16)  # int8 -> bf16
    acc_ref[...] += jnp.dot(a_bf16, h_ref[pl.ds(ks, tile_k), :],
                            preferred_element_type=jnp.float32)

    @pl.when(k == pl.num_programs(1) - 1)
    def _finalize():
        out = acc_ref[...] * drow_ref[...] + b_ref[...]    # f32 epilogue
        o_ref[...] = jnp.maximum(out, 0.0).astype(o_ref.dtype)


def gcn_aggregate(adj_i8, h_bf16, b_f32, d_f32, *, tile_i, tile_k):
    n_pad = adj_i8.shape[0]
    f_out_p = h_bf16.shape[1]
    kernel = functools.partial(_agg_kernel, tile_k=tile_k)
    return pl.pallas_call(
        kernel,
        out_shape=jax.ShapeDtypeStruct((n_pad, f_out_p), jnp.bfloat16),
        grid=(n_pad // tile_i, n_pad // tile_k),
        in_specs=[
            pl.BlockSpec((tile_i, tile_k), lambda i, k: (i, k)),   # A int8 tile
            pl.BlockSpec((n_pad, f_out_p), lambda i, k: (0, 0)),   # H resident
            pl.BlockSpec((1, f_out_p), lambda i, k: (0, 0)),       # bias
            pl.BlockSpec((tile_i, 1), lambda i, k: (i, 0)),        # d rows
        ],
        out_specs=pl.BlockSpec((tile_i, f_out_p), lambda i, k: (i, 0)),
        scratch_shapes=[pltpu.VMEM((tile_i, f_out_p), jnp.float32)],
        compiler_params=pltpu.CompilerParams(
            dimension_semantics=("parallel", "arbitrary")),
    )(adj_i8, h_bf16, b_f32, d_f32)


# ---------------------------------------------------------------------------
# Model driver: DenseGCNModel.forward (eval mode).
# ---------------------------------------------------------------------------
@jax.jit
def dense_gcn_forward(x, adj, weights, biases):
    """Returns the list of per-layer embeddings ([N, F_l] each, f32)."""
    n, f0 = x.shape
    n_pad = _round_up(n, 128)
    # Large k-tile fills the MXU / makes DMAs bandwidth-efficient; keep >=2
    # i-tiles so the "parallel" axis can shard across v7x's two TensorCores.
    tile_k = _pick_tile(n_pad, min(512, n_pad))
    tile_i = _pick_tile(n_pad, min(512, max(128, n_pad // 2)))

    # Padded adjacency built directly in int8 (entries are 0/1 -> exact),
    # no f32 n_pad^2 intermediate.
    adj_i8 = jnp.zeros((n_pad, n_pad), jnp.int8).at[:n, :n].set(
        adj.astype(jnp.int8))

    # D^-1/2 computed once (adjacency is constant across layers).
    d = deg_inv_sqrt(adj_i8, tile_i=tile_i, tile_k=tile_k)

    # Node-padded activations; carried in bf16 between layers (first input f32).
    h = jnp.zeros((n_pad, _round_up(f0, 128)), jnp.float32).at[:n, :f0].set(x)

    embeddings = []
    for w, b in zip(weights, biases):
        f_in, f_out = w.shape
        f_in_p = h.shape[1]
        f_out_p = _round_up(f_out, 128)
        w_p = jnp.zeros((f_in_p, f_out_p), jnp.bfloat16).at[:f_in, :f_out].set(
            w.astype(jnp.bfloat16))
        b_p = jnp.zeros((1, f_out_p), jnp.float32).at[0, :f_out].set(b)

        h_xw = scaled_xw(h, d, w_p, tile_m=tile_k)            # (d ⊙ X) @ W, once
        h = gcn_aggregate(adj_i8, h_xw, b_p, d,               # d ⊙ (A @ H) + b, relu
                          tile_i=tile_i, tile_k=tile_k)
        embeddings.append(h[:n, :f_out].astype(jnp.float32))  # == squeeze(out, 0)
    return embeddings


# ---------------------------------------------------------------------------
# Pure f32 reference (mirrors torch DenseGCNConv eval semantics exactly).
# ---------------------------------------------------------------------------
def reference_forward_f32(x, adj, weights, biases):
    deg = jnp.sum(adj, axis=-1)
    d = 1.0 / jnp.sqrt(jnp.maximum(deg, 1.0))
    a_norm = adj * d[:, None] * d[None, :]
    h = x
    embs = []
    for w, b in zip(weights, biases):
        h = jnp.maximum(a_norm @ (h @ w) + b[None, :], 0.0)
        embs.append(h)
    return embs


if __name__ == "__main__":
    key = jax.random.PRNGKey(0)
    n_nodes = 256                    # 2 i-tiles x 1 k-tile at these defaults
    layers_dim = [16, 32, 32, 8]     # DenseGCNModel(layers_dim)
    num_layers = len(layers_dim) - 1

    keys = jax.random.split(key, 2 + 2 * num_layers)
    k_x, k_adj, k_w = keys[0], keys[1], keys[2:]

    x = jax.random.normal(k_x, (n_nodes, layers_dim[0]), jnp.float32)

    a = (jax.random.uniform(k_adj, (n_nodes, n_nodes)) < 0.05).astype(jnp.float32)
    adj = jnp.maximum(a, a.T)                                   # symmetric 0/1
    adj = adj * (1.0 - jnp.eye(n_nodes, dtype=jnp.float32))     # no self loops

    weights, biases = [], []
    for li in range(num_layers):
        f_in, f_out = layers_dim[li], layers_dim[li + 1]
        w = jax.random.normal(k_w[2 * li], (f_in, f_out), jnp.float32) / jnp.sqrt(f_in)
        b = 0.01 * jax.random.normal(k_w[2 * li + 1], (f_out,), jnp.float32)
        weights.append(w)
        biases.append(b)

    embs = dense_gcn_forward(x, adj, weights, biases)
    embs = [jax.block_until_ready(e) for e in embs]

    refs = reference_forward_f32(x, adj, weights, biases)
    for li, (e, r) in enumerate(zip(embs, refs)):
        assert e.shape == r.shape, (e.shape, r.shape)
        err = float(jnp.max(jnp.abs(e - r)))
        scale = 1.0 + float(jnp.max(jnp.abs(r)))
        if not (err < 3e-2 * scale):
            raise AssertionError(f"layer {li}: max abs err {err} (scale {scale})")

    print("KERNEL_OK")
</pallas_src>

<mosaic_0001>
module attributes {stable_mosaic.version = 11 : i64} {
  func.func @_deg_kernel(%arg0: i32, %arg1: i32, %arg2: memref<128x256xi8, #tpu.memory_space<vmem>>, %arg3: memref<128x1xf32, #tpu.memory_space<vmem>>, %arg4: memref<128x1xf32, #tpu.memory_space<vmem>>) attributes {dimension_semantics = [#tpu.dimension_semantics<parallel>, #tpu.dimension_semantics<arbitrary>], iteration_bounds = array<i64: 2, 1>, scalar_prefetch = 0 : i64, scratch_operands = 1 : i64, tpu.core_type = #tpu.core_type<tc>, window_params = [{transform_indices = @transform_0, window_bounds = array<i64: 128, 256>}, {transform_indices = @transform_1, window_bounds = array<i64: 128, 1>}]} {
    %c0_i32 = arith.constant 0 : i32
    %0 = arith.cmpi eq, %arg1, %c0_i32 : i32
    %1 = arith.extui %0 : i1 to i32
    %c0_i32_0 = arith.constant 0 : i32
    %2 = arith.cmpi ne, %1, %c0_i32_0 : i32
    scf.if %2 {
      %cst_8 = arith.constant 0.000000e+00 : f32
      %13 = vector.broadcast %cst_8 : f32 to vector<128x1xf32>
      %c0_9 = arith.constant 0 : index
      %c0_10 = arith.constant 0 : index
      %14 = vector.load %arg4[%c0_9, %c0_10] : memref<128x1xf32, #tpu.memory_space<vmem>>, vector<128x1xf32>
      tpu.vector_store %arg4[%c0_9, %c0_10], %13 {strides = array<i32>} : memref<128x1xf32, #tpu.memory_space<vmem>>, vector<128x1xf32>,
    } else {
    }
    %c0 = arith.constant 0 : index
    %c0_1 = arith.constant 0 : index
    %3 = vector.load %arg4[%c0, %c0_1] : memref<128x1xf32, #tpu.memory_space<vmem>>, vector<128x1xf32>
    %c0_2 = arith.constant 0 : index
    %c0_3 = arith.constant 0 : index
    %4 = vector.load %arg2[%c0_2, %c0_3] : memref<128x256xi8, #tpu.memory_space<vmem>>, vector<128x256xi8>
    %5 = arith.sitofp %4 : vector<128x256xi8> to vector<128x256xf32>
    %cst = arith.constant dense<0.000000e+00> : vector<128xf32>
    %6 = vector.multi_reduction <add>, %5, %cst [1] : vector<128x256xf32> to vector<128xf32>
    %7 = vector.shape_cast %6 : vector<128xf32> to vector<128x1xf32>
    %8 = arith.addf %3, %7 : vector<128x1xf32>
    %c0_4 = arith.constant 0 : index
    %c0_5 = arith.constant 0 : index
    %9 = vector.load %arg4[%c0_4, %c0_5] : memref<128x1xf32, #tpu.memory_space<vmem>>, vector<128x1xf32>
    tpu.vector_store %arg4[%c0_4, %c0_5], %8 {strides = array<i32>} : memref<128x1xf32, #tpu.memory_space<vmem>>, vector<128x1xf32>,
    %c0_i32_6 = arith.constant 0 : i32
    %10 = arith.cmpi eq, %arg1, %c0_i32_6 : i32
    %11 = arith.extui %10 : i1 to i32
    %c0_i32_7 = arith.constant 0 : i32
    %12 = arith.cmpi ne, %11, %c0_i32_7 : i32
    scf.if %12 {
      %c0_8 = arith.constant 0 : index
      %c0_9 = arith.constant 0 : index
      %13 = vector.load %arg4[%c0_8, %c0_9] : memref<128x1xf32, #tpu.memory_space<vmem>>, vector<128x1xf32>
      %cst_10 = arith.constant 1.000000e+00 : f32
      %14 = vector.broadcast %cst_10 : f32 to vector<128x1xf32>
      %15 = arith.maximumf %13, %14 : vector<128x1xf32>
      %16 = math.rsqrt %15 : vector<128x1xf32>
      %c0_11 = arith.constant 0 : index
      %c0_12 = arith.constant 0 : index
      %17 = vector.load %arg3[%c0_11, %c0_12] : memref<128x1xf32, #tpu.memory_space<vmem>>, vector<128x1xf32>
      tpu.vector_store %arg3[%c0_11, %c0_12], %16 {strides = array<i32>} : memref<128x1xf32, #tpu.memory_space<vmem>>, vector<128x1xf32>,
    } else {
    }
    return
  }
  func.func @transform_0(%arg0: i32, %arg1: i32) -> (i32, i32) {
    %c0_i32 = arith.constant 0 : i32
    return %arg0, %arg1 : i32, i32
  }
  func.func @transform_1(%arg0: i32, %arg1: i32) -> (i32, i32) {
    %c0_i32 = arith.constant 0 : i32
    %c0_i32_0 = arith.constant 0 : i32
    return %arg0, %c0_i32 : i32, i32
  }
}

module attributes {stable_mosaic.version = 11 : i64} {
  func.func @_xw_kernel(%arg0: i32, %arg1: memref<256x128xf32, #tpu.memory_space<vmem>>, %arg2: memref<256x1xf32, #tpu.memory_space<vmem>>, %arg3: memref<128x128xbf16, #tpu.memory_space<vmem>>, %arg4: memref<256x128xbf16, #tpu.memory_space<vmem>>) attributes {dimension_semantics = [#tpu.dimension_semantics<parallel>], iteration_bounds = array<i64: 1>, scalar_prefetch = 0 : i64, scratch_operands = 0 : i64, tpu.core_type = #tpu.core_type<tc>, window_params = [{transform_indices = @transform_0, window_bounds = array<i64: 256, 128>}, {transform_indices = @transform_1, window_bounds = array<i64: 256, 1>}, {pipeline_mode = #tpu.pipeline_mode<synchronous>, transform_indices = @transform_2, window_bounds = array<i64: 128, 128>}, {transform_indices = @transform_3, window_bounds = array<i64: 256, 128>}]} {
    %c0 = arith.constant 0 : index
    %c0_0 = arith.constant 0 : index
    %0 = vector.load %arg1[%c0, %c0_0] : memref<256x128xf32, #tpu.memory_space<vmem>>, vector<256x128xf32>
    %c0_1 = arith.constant 0 : index
    %c0_2 = arith.constant 0 : index
    %1 = vector.load %arg2[%c0_1, %c0_2] : memref<256x1xf32, #tpu.memory_space<vmem>>, vector<256x1xf32>
    %2 = vector.broadcast %1 : vector<256x1xf32> to vector<256x128xf32>
    %3 = arith.mulf %0, %2 : vector<256x128xf32>
    %4 = arith.truncf %3 : vector<256x128xf32> to vector<256x128xbf16>
    %c0_3 = arith.constant 0 : index
    %c0_4 = arith.constant 0 : index
    %5 = vector.load %arg3[%c0_3, %c0_4] : memref<128x128xbf16, #tpu.memory_space<vmem>>, vector<128x128xbf16>
    %cst = arith.constant dense<0.000000e+00> : vector<256x128xf32>
    %6 = tpu.matmul %4, %5, %cst {dimension_numbers = #tpu.dot_dimension_numbers<[1], [0], [0], [1], [0, 0, 1, 1], [], []>} : vector<256x128xbf16>, vector<128x128xbf16>, vector<256x128xf32> -> vector<256x128xf32>
    %7 = arith.truncf %6 : vector<256x128xf32> to vector<256x128xbf16>
    %c0_5 = arith.constant 0 : index
    %c0_6 = arith.constant 0 : index
    %8 = vector.load %arg4[%c0_5, %c0_6] : memref<256x128xbf16, #tpu.memory_space<vmem>>, vector<256x128xbf16>
    tpu.vector_store %arg4[%c0_5, %c0_6], %7 {strides = array<i32>} : memref<256x128xbf16, #tpu.memory_space<vmem>>, vector<256x128xbf16>,
    return
  }
  func.func @transform_0(%arg0: i32) -> (i32, i32) {
    %c0_i32 = arith.constant 0 : i32
    %c0_i32_0 = arith.constant 0 : i32
    return %arg0, %c0_i32 : i32, i32
  }
  func.func @transform_1(%arg0: i32) -> (i32, i32) {
    %c0_i32 = arith.constant 0 : i32
    %c0_i32_0 = arith.constant 0 : i32
    return %arg0, %c0_i32 : i32, i32
  }
  func.func @transform_2(%arg0: i32) -> (i32, i32) {
    %c0_i32 = arith.constant 0 : i32
    %c0_i32_0 = arith.constant 0 : i32
    %c0_i32_1 = arith.constant 0 : i32
    return %c0_i32, %c0_i32_0 : i32, i32
  }
  func.func @transform_3(%arg0: i32) -> (i32, i32) {
    %c0_i32 = arith.constant 0 : i32
    %c0_i32_0 = arith.constant 0 : i32
    return %arg0, %c0_i32 : i32, i32
  }
}

module attributes {stable_mosaic.version = 11 : i64} {
  func.func @_agg_kernel(%arg0: i32, %arg1: i32, %arg2: memref<128x256xi8, #tpu.memory_space<vmem>>, %arg3: memref<256x128xbf16, #tpu.memory_space<vmem>>, %arg4: memref<1x128xf32, #tpu.memory_space<vmem>>, %arg5: memref<128x1xf32, #tpu.memory_space<vmem>>, %arg6: memref<128x128xbf16, #tpu.memory_space<vmem>>, %arg7: memref<128x128xf32, #tpu.memory_space<vmem>>) attributes {dimension_semantics = [#tpu.dimension_semantics<parallel>, #tpu.dimension_semantics<arbitrary>], iteration_bounds = array<i64: 2, 1>, scalar_prefetch = 0 : i64, scratch_operands = 1 : i64, tpu.core_type = #tpu.core_type<tc>, window_params = [{transform_indices = @transform_0, window_bounds = array<i64: 128, 256>}, {pipeline_mode = #tpu.pipeline_mode<synchronous>, transform_indices = @transform_1, window_bounds = array<i64: 256, 128>}, {pipeline_mode = #tpu.pipeline_mode<synchronous>, transform_indices = @transform_2, window_bounds = array<i64: 1, 128>}, {transform_indices = @transform_3, window_bounds = array<i64: 128, 1>}, {transform_indices = @transform_4, window_bounds = array<i64: 128, 128>}]} {
    %c0_i32 = arith.constant 0 : i32
    %0 = arith.cmpi eq, %arg1, %c0_i32 : i32
    %1 = arith.extui %0 : i1 to i32
    %c0_i32_0 = arith.constant 0 : i32
    %2 = arith.cmpi ne, %1, %c0_i32_0 : i32
    scf.if %2 {
      %cst_9 = arith.constant 0.000000e+00 : f32
      %17 = vector.broadcast %cst_9 : f32 to vector<128x128xf32>
      %c0_10 = arith.constant 0 : index
      %c0_11 = arith.constant 0 : index
      %18 = vector.load %arg7[%c0_10, %c0_11] : memref<128x128xf32, #tpu.memory_space<vmem>>, vector<128x128xf32>
      tpu.vector_store %arg7[%c0_10, %c0_11], %17 {strides = array<i32>} : memref<128x128xf32, #tpu.memory_space<vmem>>, vector<128x128xf32>,
    } else {
    }
    %c256_i32 = arith.constant 256 : i32
    %3 = arith.muli %arg1, %c256_i32 : i32
    %4 = tpu.assume_multiple %3, 256 : i32
    %c0 = arith.constant 0 : index
    %c0_1 = arith.constant 0 : index
    %5 = vector.load %arg2[%c0, %c0_1] : memref<128x256xi8, #tpu.memory_space<vmem>>, vector<128x256xi8>
    %6 = arith.sitofp %5 : vector<128x256xi8> to vector<128x256xf32>
    %7 = arith.truncf %6 : vector<128x256xf32> to vector<128x256xbf16>
    %c0_2 = arith.constant 0 : index
    %c0_3 = arith.constant 0 : index
    %8 = vector.load %arg7[%c0_2, %c0_3] : memref<128x128xf32, #tpu.memory_space<vmem>>, vector<128x128xf32>
    %9 = arith.index_cast %4 : i32 to index
    %c0_4 = arith.constant 0 : index
    %10 = vector.load %arg3[%9, %c0_4] : memref<256x128xbf16, #tpu.memory_space<vmem>>, vector<256x128xbf16>
    %cst = arith.constant dense<0.000000e+00> : vector<128x128xf32>
    %11 = tpu.matmul %7, %10, %cst {dimension_numbers = #tpu.dot_dimension_numbers<[1], [0], [0], [1], [0, 0, 1, 1], [], []>} : vector<128x256xbf16>, vector<256x128xbf16>, vector<128x128xf32> -> vector<128x128xf32>
    %12 = arith.addf %8, %11 : vector<128x128xf32>
    %c0_5 = arith.constant 0 : index
    %c0_6 = arith.constant 0 : index
    %13 = vector.load %arg7[%c0_5, %c0_6] : memref<128x128xf32, #tpu.memory_space<vmem>>, vector<128x128xf32>
    tpu.vector_store %arg7[%c0_5, %c0_6], %12 {strides = array<i32>} : memref<128x128xf32, #tpu.memory_space<vmem>>, vector<128x128xf32>,
    %c0_i32_7 = arith.constant 0 : i32
    %14 = arith.cmpi eq, %arg1, %c0_i32_7 : i32
    %15 = arith.extui %14 : i1 to i32
    %c0_i32_8 = arith.constant 0 : i32
    %16 = arith.cmpi ne, %15, %c0_i32_8 : i32
    scf.if %16 {
      %c0_9 = arith.constant 0 : index
      %c0_10 = arith.constant 0 : index
      %17 = vector.load %arg7[%c0_9, %c0_10] : memref<128x128xf32, #tpu.memory_space<vmem>>, vector<128x128xf32>
      %c0_11 = arith.constant 0 : index
      %c0_12 = arith.constant 0 : index
      %18 = vector.load %arg5[%c0_11, %c0_12] : memref<128x1xf32, #tpu.memory_space<vmem>>, vector<128x1xf32>
      %19 = vector.broadcast %18 : vector<128x1xf32> to vector<128x128xf32>
      %20 = arith.mulf %17, %19 : vector<128x128xf32>
      %c0_13 = arith.constant 0 : index
      %c0_14 = arith.constant 0 : index
      %21 = vector.load %arg4[%c0_13, %c0_14] : memref<1x128xf32, #tpu.memory_space<vmem>>, vector<1x128xf32>
      %22 = vector.broadcast %21 : vector<1x128xf32> to vector<128x128xf32>
      %23 = arith.addf %20, %22 : vector<128x128xf32>
      %cst_15 = arith.constant 0.000000e+00 : f32
      %24 = vector.broadcast %cst_15 : f32 to vector<128x128xf32>
      %25 = arith.maximumf %23, %24 : vector<128x128xf32>
      %26 = arith.truncf %25 : vector<128x128xf32> to vector<128x128xbf16>
      %c0_16 = arith.constant 0 : index
      %c0_17 = arith.constant 0 : index
      %27 = vector.load %arg6[%c0_16, %c0_17] : memref<128x128xbf16, #tpu.memory_space<vmem>>, vector<128x128xbf16>
      tpu.vector_store %arg6[%c0_16, %c0_17], %26 {strides = array<i32>} : memref<128x128xbf16, #tpu.memory_space<vmem>>, vector<128x128xbf16>,
    } else {
    }
    return
  }
  func.func @transform_0(%arg0: i32, %arg1: i32) -> (i32, i32) {
    %c0_i32 = arith.constant 0 : i32
    return %arg0, %arg1 : i32, i32
  }
  func.func @transform_1(%arg0: i32, %arg1: i32) -> (i32, i32) {
    %c0_i32 = arith.constant 0 : i32
    %c0_i32_0 = arith.constant 0 : i32
    %c0_i32_1 = arith.constant 0 : i32
    return %c0_i32, %c0_i32_0 : i32, i32
  }
  func.func @transform_2(%arg0: i32, %arg1: i32) -> (i32, i32) {
    %c0_i32 = arith.constant 0 : i32
    %c0_i32_0 = arith.constant 0 : i32
    %c0_i32_1 = arith.constant 0 : i32
    return %c0_i32, %c0_i32_0 : i32, i32
  }
  func.func @transform_3(%arg0: i32, %arg1: i32) -> (i32, i32) {
    %c0_i32 = arith.constant 0 : i32
    %c0_i32_0 = arith.constant 0 : i32
    return %arg0, %c0_i32 : i32, i32
  }
  func.func @transform_4(%arg0: i32, %arg1: i32) -> (i32, i32) {
    %c0_i32 = arith.constant 0 : i32
    %c0_i32_0 = arith.constant 0 : i32
    return %arg0, %c0_i32 : i32, i32
  }
}

module attributes {stable_mosaic.version = 11 : i64} {
  func.func @_xw_kernel(%arg0: i32, %arg1: memref<256x128xbf16, #tpu.memory_space<vmem>>, %arg2: memref<256x1xf32, #tpu.memory_space<vmem>>, %arg3: memref<128x128xbf16, #tpu.memory_space<vmem>>, %arg4: memref<256x128xbf16, #tpu.memory_space<vmem>>) attributes {dimension_semantics = [#tpu.dimension_semantics<parallel>], iteration_bounds = array<i64: 1>, scalar_prefetch = 0 : i64, scratch_operands = 0 : i64, tpu.core_type = #tpu.core_type<tc>, window_params = [{transform_indices = @transform_0, window_bounds = array<i64: 256, 128>}, {transform_indices = @transform_1, window_bounds = array<i64: 256, 1>}, {pipeline_mode = #tpu.pipeline_mode<synchronous>, transform_indices = @transform_2, window_bounds = array<i64: 128, 128>}, {transform_indices = @transform_3, window_bounds = array<i64: 256, 128>}]} {
    %c0 = arith.constant 0 : index
    %c0_0 = arith.constant 0 : index
    %0 = vector.load %arg1[%c0, %c0_0] : memref<256x128xbf16, #tpu.memory_space<vmem>>, vector<256x128xbf16>
    %1 = arith.extf %0 : vector<256x128xbf16> to vector<256x128xf32>
    %c0_1 = arith.constant 0 : index
    %c0_2 = arith.constant 0 : index
    %2 = vector.load %arg2[%c0_1, %c0_2] : memref<256x1xf32, #tpu.memory_space<vmem>>, vector<256x1xf32>
    %3 = vector.broadcast %2 : vector<256x1xf32> to vector<256x128xf32>
    %4 = arith.mulf %1, %3 : vector<256x128xf32>
    %5 = arith.truncf %4 : vector<256x128xf32> to vector<256x128xbf16>
    %c0_3 = arith.constant 0 : index
    %c0_4 = arith.constant 0 : index
    %6 = vector.load %arg3[%c0_3, %c0_4] : memref<128x128xbf16, #tpu.memory_space<vmem>>, vector<128x128xbf16>
    %cst = arith.constant dense<0.000000e+00> : vector<256x128xf32>
    %7 = tpu.matmul %5, %6, %cst {dimension_numbers = #tpu.dot_dimension_numbers<[1], [0], [0], [1], [0, 0, 1, 1], [], []>} : vector<256x128xbf16>, vector<128x128xbf16>, vector<256x128xf32> -> vector<256x128xf32>
    %8 = arith.truncf %7 : vector<256x128xf32> to vector<256x128xbf16>
    %c0_5 = arith.constant 0 : index
    %c0_6 = arith.constant 0 : index
    %9 = vector.load %arg4[%c0_5, %c0_6] : memref<256x128xbf16, #tpu.memory_space<vmem>>, vector<256x128xbf16>
    tpu.vector_store %arg4[%c0_5, %c0_6], %8 {strides = array<i32>} : memref<256x128xbf16, #tpu.memory_space<vmem>>, vector<256x128xbf16>,
    return
  }
  func.func @transform_0(%arg0: i32) -> (i32, i32) {
    %c0_i32 = arith.constant 0 : i32
    %c0_i32_0 = arith.constant 0 : i32
    return %arg0, %c0_i32 : i32, i32
  }
  func.func @transform_1(%arg0: i32) -> (i32, i32) {
    %c0_i32 = arith.constant 0 : i32
    %c0_i32_0 = arith.constant 0 : i32
    return %arg0, %c0_i32 : i32, i32
  }
  func.func @transform_2(%arg0: i32) -> (i32, i32) {
    %c0_i32 = arith.constant 0 : i32
    %c0_i32_0 = arith.constant 0 : i32
    %c0_i32_1 = arith.constant 0 : i32
    return %c0_i32, %c0_i32_0 : i32, i32
  }
  func.func @transform_3(%arg0: i32) -> (i32, i32) {
    %c0_i32 = arith.constant 0 : i32
    %c0_i32_0 = arith.constant 0 : i32
    return %arg0, %c0_i32 : i32, i32
  }
}

</mosaic_0001>

<llo_original>
// kernel: dense_gcn_forward.7
$region0: #{dense_gcn_forward.7}
  #allocation0 [shape = 'u32[]', space=smem, size = 0x4, offset = 0x4, fixed_abs, tag = 'smem constant byte address 0x4 - core index']
  #allocation1 [shape = 'u32[144,128]{1,0:T(1,128)}', space=vmem, size = 0x12000, scoped, tag = 'internal scratch']
  #allocation2 [shape = 'f32[128,1]{1,0:T(8,128)}', space=vmem, size = 0x10000, scoped, tag = 'scratch operand']
  %s0 = inlined_call_operand.vmem [shape: s8[256,256], index: 0, kind: input, shape index: {}]
  %s1 = inlined_call_operand.vmem [shape: f32[256,1], index: 1, kind: output, shape index: {}]
  %s2 = sld [smem:[#allocation0]]
  $region45: #{dense_gcn_forward.7} parent=0
    _
  %s4 = ssub.s32 1, %s2
  %s5 = scalar_select 0, %s4, %s2
  loop: start=0, step=1, limit=4
  $region2: #{dense_gcn_forward.7} parent=0 // loop_pre_header
    _
  $region3: #{dense_gcn_forward.7} parent=0 // loop_header
    %s7 = sphi 0, %s11
    %p8 = scmp.ge.s32.totalorder %s7, 4
    %s14 = sphi 0, %s26
    %s15 = sphi 0, %s22
    %s16 = sphi 0, %s14
    %s17 = sphi 0, %s15
    %s18 = sphi 0, %s16
    %s19 = sphi 0, %s17
    %s31 = sphi 0, %s33
    %s34 = sphi 0, %s31
    %s35 = sphi 0, %s34
    %s51 = sphi 0, %s35
    %s57 = sphi 0, %s59
    %s60 = sphi 0, %s57
    %s61 = sphi 0, %s60
    %s77 = sphi 0, %s61
  $region4: #{dense_gcn_forward.7} parent=0 // loop_header_branch
    %10 = sbr.rel (%p8) target = $region8
  $region5: #{dense_gcn_forward.7} parent=0 // loop_body
    %s12 = ssub.s32 %s7, 1
    %s13 = ssub.s32 %s7, 2
    %s20 = sadd.s32 1, %s15
    %p21 = scmp.ge.s32.totalorder %s20, 1
    %s22 = scalar_select %p21, 0, %s20
    %s23 = sadd.s32 1, %s14
    %s24 = scalar_select %p21, %s23, %s14
    %p25 = scmp.ge.s32.totalorder %s24, 2
    %s26 = scalar_select %p25, 0, %s24
    %s27 = ssub.s32 %s14, %s26
    %s28 = ssub.s32 %s15, %s22
    %s29 = sor.u32 %s27, %s28
    %p30 = scmp.eq.s32.totalorder %s29, 0
    %s32 = sadd.s32 %s31, 1
    %s33 = scalar_select %p30, %s31, %s32
    %p36 = pneg %p30
    %p37 = scmp.eq.s32.totalorder %s7, 1
    %p38 = por %p36, %p37
    %p39 = scmp.ne.s32.totalorder %s31, %s34
    %p40 = scmp.eq.s32.totalorder %s7, 0
    %p41 = por %p39, %p40
    %p42 = scmp.ne.s32.totalorder %s31, %s34
    %p43 = scmp.eq.s32.totalorder %s12, 1
    %p44 = por %p42, %p43
    %p45 = scmp.ne.s32.totalorder %s34, %s35
    %p46 = scmp.eq.s32.totalorder %s12, 0
    %p47 = por %p45, %p46
    %p48 = scmp.ne.s32.totalorder %s34, %s35
    %p49 = scmp.eq.s32.totalorder %s13, 1
    %p50 = por %p48, %p49
    %p52 = scmp.ne.s32.totalorder %s35, %s51
    %p53 = scmp.eq.s32.totalorder %s13, 0
    %p54 = por %p52, %p53
    %s55 = ssub.s32 %s14, %s26
    %p56 = scmp.eq.s32.totalorder %s55, 0
    %s58 = sadd.s32 %s57, 1
    %s59 = scalar_select %p56, %s57, %s58
    %p62 = pneg %p56
    %p63 = scmp.eq.s32.totalorder %s7, 1
    %p64 = por %p62, %p63
    %p65 = scmp.ne.s32.totalorder %s57, %s60
    %p66 = scmp.eq.s32.totalorder %s7, 0
    %p67 = por %p65, %p66
    %p68 = scmp.ne.s32.totalorder %s57, %s60
    %p69 = scmp.eq.s32.totalorder %s12, 1
    %p70 = por %p68, %p69
    %p71 = scmp.ne.s32.totalorder %s60, %s61
    %p72 = scmp.eq.s32.totalorder %s12, 0
    %p73 = por %p71, %p72
    %p74 = scmp.ne.s32.totalorder %s60, %s61
    %p75 = scmp.eq.s32.totalorder %s13, 1
    %p76 = por %p74, %p75
    %p78 = scmp.ne.s32.totalorder %s61, %s77
    %p79 = scmp.eq.s32.totalorder %s13, 0
    %p80 = por %p78, %p79
    %p81 = scmp.le.s32.totalorder 1, %s7
    %p82 = scmp.lt.s32.totalorder %s7, 3
    %p83 = pnand %p81, %p82
    %p84 = pneg %p83
    // Predicated region
    $region9: #{dense_gcn_forward.7} parent=5 // pred_check
      _
    $region10: #{dense_gcn_forward.7} parent=5 // pred_check_branch
      %86 = sbr.rel (%p83) target = $region12
    $region11: #{dense_gcn_forward.7} parent=5 // pred_region
      %s87 = ssub.s32 %s7, 1
    $region12: #{dense_gcn_forward.7} parent=5 // pred_fallthru
      _
    %p88 = scmp.lt.s32.totalorder %s7, 2
    // Predicated region
    $region13: #{dense_gcn_forward.7} parent=5 // pred_check
      %p89 = pneg %p88
    $region14: #{dense_gcn_forward.7} parent=5 // pred_check_branch
      %91 = sbr.rel (%p89) target = $region16
    $region15: #{dense_gcn_forward.7} parent=5 // pred_region
      // Predicated region
      $region17: #{dense_gcn_forward.7} parent=15 // pred_check
        %p92 = pneg %p41
      $region18: #{dense_gcn_forward.7} parent=15 // pred_check_branch
        %94 = sbr.rel (%p92) target = $region20
      $region19: #{dense_gcn_forward.7} parent=15 // pred_region
        %s95 = smul.u32 4, %s14
        %s96 = smul.u32 2, %s15
        %p97 = scmp.lt.s32.totalorder %s95, 7
        %s98 = scalar_select %p97, %s95, 7
        %p99 = scmp.lt.s32.totalorder %s96, 1
        %s100 = scalar_select %p99, %s96, 1
        %s101 = smul.addr %s98, 2
        %s102 = sadd.s32 %s100, %s101
        %s103 = smul.addr %s102, 8
        %s104 = scalar_lea.vmem %s0, %s103
        %s105 = smul.u32 4, %s14
        %s106 = smul.u32 2, %s15
      $region20: #{dense_gcn_forward.7} parent=15 // pred_fallthru
        _
    $region16: #{dense_gcn_forward.7} parent=5 // pred_fallthru
      _
    %p107 = scmp.le.s32.totalorder 1, %s7
    %p108 = scmp.lt.s32.totalorder %s7, 3
    %p109 = pnand %p107, %p108
    %p110 = pneg %p109
    // Predicated region
    $region21: #{dense_gcn_forward.7} parent=5 // pred_check
      _
    $region22: #{dense_gcn_forward.7} parent=5 // pred_check_branch
      %112 = sbr.rel (%p109) target = $region24
    $region23: #{dense_gcn_forward.7} parent=5 // pred_region
      %s113 = ssub.s32 %s7, 1
      %s114 = smul.u32 4, %s16
      %s115 = smul.u32 2, %s17
      %p116 = scmp.lt.s32.totalorder %s114, 7
      %s117 = scalar_select %p116, %s114, 7
      %p118 = scmp.lt.s32.totalorder %s115, 1
      %s119 = scalar_select %p118, %s115, 1
      %s120 = smul.addr %s117, 2
      %s121 = sadd.s32 %s119, %s120
      %s122 = smul.addr %s121, 8
      %s123 = scalar_lea.vmem %s0, %s122
      %p124 = pneg %p47
      %p125 = pneg %p44
      %p126 = pneg %p73
      %p127 = pneg %p70
      %s128 = smul.u32 16, %s16
      %p129 = scmp.lt.s32.totalorder %s128, 31
      %s130 = scalar_select %p129, %s128, 31
      %s131 = smul.addr %s130, 8
      %s132 = scalar_lea.vmem %s1, %s131
      %s133 = smul.u32 4, %s16
      %s134 = smul.u32 2, %s17
      %p135 = scmp.lt.s32.totalorder %s133, 7
      %s136 = scalar_select %p135, %s133, 7
      %p137 = scmp.lt.s32.totalorder %s134, 1
      %s138 = scalar_select %p137, %s134, 1
      %s139 = smul.addr %s136, 2
      %s140 = sadd.s32 %s138, %s139
      %s141 = smul.addr %s140, 8
      %s142 = scalar_lea.vmem %s0, %s141
      %s143 = smul.u32 4, %s16
      %s144 = smul.u32 2, %s17
      %s145 = smul.u32 16, %s16
      %p146 = scmp.lt.s32.totalorder %s145, 31
      %s147 = scalar_select %p146, %s145, 31
      %s148 = smul.addr %s147, 8
      %s149 = scalar_lea.vmem %s1, %s148
      %s150 = smul.u32 16, %s16
      %p151 = scmp.eq.s32.totalorder %s17, 0
      // Predicated region
      $region25: #{dense_gcn_forward.7} parent=23 // pred_check
        %p152 = pneg %p151
      $region26: #{dense_gcn_forward.7} parent=23 // pred_check_branch
        %154 = sbr.rel (%p152) target = $region28
      $region27: #{dense_gcn_forward.7} parent=23 // pred_region
        %vm155 = vcmask 7168
        %156 = vst.msk [vmem:[#allocation2] sm:$0xff] %vm155, 0.0
        %157 = vst.msk [vmem:[#allocation2 + $0x8] sm:$0xff] %vm155, 0.0
        %158 = vst.msk [vmem:[#allocation2 + $0x10] sm:$0xff] %vm155, 0.0
        %159 = vst.msk [vmem:[#allocation2 + $0x18] sm:$0xff] %vm155, 0.0
        %160 = vst.msk [vmem:[#allocation2 + $0x20] sm:$0xff] %vm155, 0.0
        %161 = vst.msk [vmem:[#allocation2 + $0x28] sm:$0xff] %vm155, 0.0
        %162 = vst.msk [vmem:[#allocation2 + $0x30] sm:$0xff] %vm155, 0.0
        %163 = vst.msk [vmem:[#allocation2 + $0x38] sm:$0xff] %vm155, 0.0
        %164 = vst.msk [vmem:[#allocation2 + $0x40] sm:$0xff] %vm155, 0.0
        %165 = vst.msk [vmem:[#allocation2 + $0x48] sm:$0xff] %vm155, 0.0
        %166 = vst.msk [vmem:[#allocation2 + $0x50] sm:$0xff] %vm155, 0.0
        %167 = vst.msk [vmem:[#allocation2 + $0x58] sm:$0xff] %vm155, 0.0
        %168 = vst.msk [vmem:[#allocation2 + $0x60] sm:$0xff] %vm155, 0.0
        %169 = vst.msk [vmem:[#allocation2 + $0x68] sm:$0xff] %vm155, 0.0
        %170 = vst.msk [vmem:[#allocation2 + $0x70] sm:$0xff] %vm155, 0.0
        %171 = vst.msk [vmem:[#allocation2 + $0x78] sm:$0xff] %vm155, 0.0
      $region28: #{dense_gcn_forward.7} parent=23 // pred_fallthru
        _
      %v172 = vld [vmem:[#allocation2] sm:$0xff]
      %v173 = vld [vmem:[#allocation2 + $0x8] sm:$0xff]
      %v174 = vld [vmem:[#allocation2 + $0x10] sm:$0xff]
      %v175 = vld [vmem:[#allocation2 + $0x18] sm:$0xff]
      %v176 = vld [vmem:[#allocation2 + $0x20] sm:$0xff]
      %v177 = vld [vmem:[#allocation2 + $0x28] sm:$0xff]
      %v178 = vld [vmem:[#allocation2 + $0x30] sm:$0xff]
      %v179 = vld [vmem:[#allocation2 + $0x38] sm:$0xff]
      %v180 = vld [vmem:[#allocation2 + $0x40] sm:$0xff]
      %v181 = vld [vmem:[#allocation2 + $0x48] sm:$0xff]
      %v182 = vld [vmem:[#allocation2 + $0x50] sm:$0xff]
      %v183 = vld [vmem:[#allocation2 + $0x58] sm:$0xff]
      %v184 = vld [vmem:[#allocation2 + $0x60] sm:$0xff]
      %v185 = vld [vmem:[#allocation2 + $0x68] sm:$0xff]
      %v186 = vld [vmem:[#allocation2 + $0x70] sm:$0xff]
      %v187 = vld [vmem:[#allocation2 + $0x78] sm:$0xff]
      %v188 = vld [vmem:[%s142] sm:$0xff]
      %v189 = vld [vmem:[%s142 + $0x8] sm:$0xff]
      %v190 = vld [vmem:[%s142 + $0x10] sm:$0xff]
      %v191 = vld [vmem:[%s142 + $0x18] sm:$0xff]
      %v192 = vld [vmem:[%s142 + $0x20] sm:$0xff]
      %v193 = vld [vmem:[%s142 + $0x28] sm:$0xff]
      %v194 = vld [vmem:[%s142 + $0x30] sm:$0xff]
      %v195 = vld [vmem:[%s142 + $0x38] sm:$0xff]
      %v196 = vunpack.c.0.s8 %v188
      %v197 = vunpack.c.0.s8 %v189
      %v198 = vunpack.c.1.s8 %v188
      %v199 = vunpack.c.1.s8 %v189
      %v200 = vunpack.c.2.s8 %v188
      %v201 = vunpack.c.2.s8 %v189
      %v202 = vunpack.c.3.s8 %v188
      %v203 = vunpack.c.3.s8 %v189
      %v204 = vunpack.c.0.s8 %v190
      %v205 = vunpack.c.0.s8 %v191
      %v206 = vunpack.c.1.s8 %v190
      %v207 = vunpack.c.1.s8 %v191
      %v208 = vunpack.c.2.s8 %v190
      %v209 = vunpack.c.2.s8 %v191
      %v210 = vunpack.c.3.s8 %v190
      %v211 = vunpack.c.3.s8 %v191
      %v212 = vunpack.c.0.s8 %v192
      %v213 = vunpack.c.0.s8 %v193
      %v214 = vunpack.c.1.s8 %v192
      %v215 = vunpack.c.1.s8 %v193
      %v216 = vunpack.c.2.s8 %v192
      %v217 = vunpack.c.2.s8 %v193
      %v218 = vunpack.c.3.s8 %v192
      %v219 = vunpack.c.3.s8 %v193
      %v220 = vunpack.c.0.s8 %v194
      %v221 = vunpack.c.0.s8 %v195
      %v222 = vunpack.c.1.s8 %v194
      %v223 = vunpack.c.1.s8 %v195
      %v224 = vunpack.c.2.s8 %v194
      %v225 = vunpack.c.2.s8 %v195
      %v226 = vunpack.c.3.s8 %v194
      %v227 = vunpack.c.3.s8 %v195
      %v228 = vcvt.s32.f32 %v196
      %v229 = vcvt.s32.f32 %v197
      %v230 = vcvt.s32.f32 %v198
      %v231 = vcvt.s32.f32 %v199
      %v232 = vcvt.s32.f32 %v200
      %v233 = vcvt.s32.f32 %v201
      %v234 = vcvt.s32.f32 %v202
      %v235 = vcvt.s32.f32 %v203
      %v236 = vcvt.s32.f32 %v204
      %v237 = vcvt.s32.f32 %v205
      %v238 = vcvt.s32.f32 %v206
      %v239 = vcvt.s32.f32 %v207
      %v240 = vcvt.s32.f32 %v208
      %v241 = vcvt.s32.f32 %v209
      %v242 = vcvt.s32.f32 %v210
      %v243 = vcvt.s32.f32 %v211
      %v244 = vcvt.s32.f32 %v212
      %v245 = vcvt.s32.f32 %v213
      %v246 = vcvt.s32.f32 %v214
      %v247 = vcvt.s32.f32 %v215
      %v248 = vcvt.s32.f32 %v216
      %v249 = vcvt.s32.f32 %v217
      %v250 = vcvt.s32.f32 %v218
      %v251 = vcvt.s32.f32 %v219
      %v252 = vcvt.s32.f32 %v220
      %v253 = vcvt.s32.f32 %v221
      %v254 = vcvt.s32.f32 %v222
      %v255 = vcvt.s32.f32 %v223
      %v256 = vcvt.s32.f32 %v224
      %v257 = vcvt.s32.f32 %v225
      %v258 = vcvt.s32.f32 %v226
      %v259 = vcvt.s32.f32 %v227
      %v260 = vadd.f32 %v228, %v229
      %261 = vadd.xlane.f32.xlu0 %v260
      %v262 = vpop.xlane.xlu0 %261
      %v263 = vadd.f32 %v230, %v231
      %264 = vadd.xlane.f32.xlu0 %v263
      %v265 = vpop.xlane.xlu0 %264
      %v266 = vadd.f32 %v232, %v233
      %267 = vadd.xlane.f32.xlu0 %v266
      %v268 = vpop.xlane.xlu0 %267
      %v269 = vadd.f32 %v234, %v235
      %270 = vadd.xlane.f32.xlu0 %v269
      %v271 = vpop.xlane.xlu0 %270
      %v272 = vadd.f32 %v236, %v237
      %273 = vadd.xlane.f32.xlu0 %v272
      %v274 = vpop.xlane.xlu0 %273
      %v275 = vadd.f32 %v238, %v239
      %276 = vadd.xlane.f32.xlu0 %v275
      %v277 = vpop.xlane.xlu0 %276
      %v278 = vadd.f32 %v240, %v241
      %279 = vadd.xlane.f32.xlu0 %v278
      %v280 = vpop.xlane.xlu0 %279
      %v281 = vadd.f32 %v242, %v243
      %282 = vadd.xlane.f32.xlu0 %v281
      %v283 = vpop.xlane.xlu0 %282
      %v284 = vadd.f32 %v244, %v245
      %285 = vadd.xlane.f32.xlu0 %v284
      %v286 = vpop.xlane.xlu0 %285
      %v287 = vadd.f32 %v246, %v247
      %288 = vadd.xlane.f32.xlu0 %v287
      %v289 = vpop.xlane.xlu0 %288
      %v290 = vadd.f32 %v248, %v249
      %291 = vadd.xlane.f32.xlu0 %v290
      %v292 = vpop.xlane.xlu0 %291
      %v293 = vadd.f32 %v250, %v251
      %294 = vadd.xlane.f32.xlu0 %v293
      %v295 = vpop.xlane.xlu0 %294
      %v296 = vadd.f32 %v252, %v253
      %297 = vadd.xlane.f32.xlu0 %v296
      %v298 = vpop.xlane.xlu0 %297
      %v299 = vadd.f32 %v254, %v255
      %300 = vadd.xlane.f32.xlu0 %v299
      %v301 = vpop.xlane.xlu0 %300
      %v302 = vadd.f32 %v256, %v257
      %303 = vadd.xlane.f32.xlu0 %v302
      %v304 = vpop.xlane.xlu0 %303
      %v305 = vadd.f32 %v258, %v259
      %306 = vadd.xlane.f32.xlu0 %v305
      %v307 = vpop.xlane.xlu0 %306
      %v308 = vadd.f32 %v172, %v262
      %v309 = vadd.f32 %v173, %v265
      %v310 = vadd.f32 %v174, %v268
      %v311 = vadd.f32 %v175, %v271
      %v312 = vadd.f32 %v176, %v274
      %v313 = vadd.f32 %v177, %v277
      %v314 = vadd.f32 %v178, %v280
      %v315 = vadd.f32 %v179, %v283
      %v316 = vadd.f32 %v180, %v286
      %v317 = vadd.f32 %v181, %v289
      %v318 = vadd.f32 %v182, %v292
      %v319 = vadd.f32 %v183, %v295
      %v320 = vadd.f32 %v184, %v298
      %v321 = vadd.f32 %v185, %v301
      %v322 = vadd.f32 %v186, %v304
      %v323 = vadd.f32 %v187, %v307
      %vm324 = vcmask 7168
      %325 = vst.msk [vmem:[#allocation2] sm:$0xff] %vm324, %v308
      %326 = vst.msk [vmem:[#allocation2 + $0x8] sm:$0xff] %vm324, %v309
      %327 = vst.msk [vmem:[#allocation2 + $0x10] sm:$0xff] %vm324, %v310
      %328 = vst.msk [vmem:[#allocation2 + $0x18] sm:$0xff] %vm324, %v311
      %329 = vst.msk [vmem:[#allocation2 + $0x20] sm:$0xff] %vm324, %v312
      %330 = vst.msk [vmem:[#allocation2 + $0x28] sm:$0xff] %vm324, %v313
      %331 = vst.msk [vmem:[#allocation2 + $0x30] sm:$0xff] %vm324, %v314
      %332 = vst.msk [vmem:[#allocation2 + $0x38] sm:$0xff] %vm324, %v315
      %333 = vst.msk [vmem:[#allocation2 + $0x40] sm:$0xff] %vm324, %v316
      %334 = vst.msk [vmem:[#allocation2 + $0x48] sm:$0xff] %vm324, %v317
      %335 = vst.msk [vmem:[#allocation2 + $0x50] sm:$0xff] %vm324, %v318
      %336 = vst.msk [vmem:[#allocation2 + $0x58] sm:$0xff] %vm324, %v319
      %337 = vst.msk [vmem:[#allocation2 + $0x60] sm:$0xff] %vm324, %v320
      %338 = vst.msk [vmem:[#allocation2 + $0x68] sm:$0xff] %vm324, %v321
      %339 = vst.msk [vmem:[#allocation2 + $0x70] sm:$0xff] %vm324, %v322
      %340 = vst.msk [vmem:[#allocation2 + $0x78] sm:$0xff] %vm324, %v323
      // Predicated region
      $region29: #{dense_gcn_forward.7} parent=23 // pred_check
        %p341 = pneg %p151
      $region30: #{dense_gcn_forward.7} parent=23 // pred_check_branch
        %343 = sbr.rel (%p341) target = $region32
      $region31: #{dense_gcn_forward.7} parent=23 // pred_region
        %v344 = vld [vmem:[#allocation2] sm:$0xff]
        %v345 = vld [vmem:[#allocation2 + $0x8] sm:$0xff]
        %v346 = vld [vmem:[#allocation2 + $0x10] sm:$0xff]
        %v347 = vld [vmem:[#allocation2 + $0x18] sm:$0xff]
        %v348 = vld [vmem:[#allocation2 + $0x20] sm:$0xff]
        %v349 = vld [vmem:[#allocation2 + $0x28] sm:$0xff]
        %v350 = vld [vmem:[#allocation2 + $0x30] sm:$0xff]
        %v351 = vld [vmem:[#allocation2 + $0x38] sm:$0xff]
        %v352 = vld [vmem:[#allocation2 + $0x40] sm:$0xff]
        %v353 = vld [vmem:[#allocation2 + $0x48] sm:$0xff]
        %v354 = vld [vmem:[#allocation2 + $0x50] sm:$0xff]
        %v355 = vld [vmem:[#allocation2 + $0x58] sm:$0xff]
        %v356 = vld [vmem:[#allocation2 + $0x60] sm:$0xff]
        %v357 = vld [vmem:[#allocation2 + $0x68] sm:$0xff]
        %v358 = vld [vmem:[#allocation2 + $0x70] sm:$0xff]
        %v359 = vld [vmem:[#allocation2 + $0x78] sm:$0xff]
        %v360 = vmax.f32 %v344, 1.0
        %v361 = vmax.f32 %v345, 1.0
        %v362 = vmax.f32 %v346, 1.0
        %v363 = vmax.f32 %v347, 1.0
        %v364 = vmax.f32 %v348, 1.0
        %v365 = vmax.f32 %v349, 1.0
        %v366 = vmax.f32 %v350, 1.0
        %v367 = vmax.f32 %v351, 1.0
        %v368 = vmax.f32 %v352, 1.0
        %v369 = vmax.f32 %v353, 1.0
        %v370 = vmax.f32 %v354, 1.0
        %v371 = vmax.f32 %v355, 1.0
        %v372 = vmax.f32 %v356, 1.0
        %v373 = vmax.f32 %v357, 1.0
        %v374 = vmax.f32 %v358, 1.0
        %v375 = vmax.f32 %v359, 1.0
        %v376 = vrsqrt.pop %v360
        %v377 = vrsqrt.pop %v361
        %v378 = vrsqrt.pop %v362
        %v379 = vrsqrt.pop %v363
        %v380 = vrsqrt.pop %v364
        %v381 = vrsqrt.pop %v365
        %v382 = vrsqrt.pop %v366
        %v383 = vrsqrt.pop %v367
        %v384 = vrsqrt.pop %v368
        %v385 = vrsqrt.pop %v369
        %v386 = vrsqrt.pop %v370
        %v387 = vrsqrt.pop %v371
        %v388 = vrsqrt.pop %v372
        %v389 = vrsqrt.pop %v373
        %v390 = vrsqrt.pop %v374
        %v391 = vrsqrt.pop %v375
        %392 = vst.msk [vmem:[%s149] sm:$0xff] %vm324, %v376
        %393 = vst.msk [vmem:[%s149 + $0x8] sm:$0xff] %vm324, %v377
        %394 = vst.msk [vmem:[%s149 + $0x10] sm:$0xff] %vm324, %v378
        %395 = vst.msk [vmem:[%s149 + $0x18] sm:$0xff] %vm324, %v379
        %396 = vst.msk [vmem:[%s149 + $0x20] sm:$0xff] %vm324, %v380
        %397 = vst.msk [vmem:[%s149 + $0x28] sm:$0xff] %vm324, %v381
        %398 = vst.msk [vmem:[%s149 + $0x30] sm:$0xff] %vm324, %v382
        %399 = vst.msk [vmem:[%s149 + $0x38] sm:$0xff] %vm324, %v383
        %400 = vst.msk [vmem:[%s149 + $0x40] sm:$0xff] %vm324, %v384
        %401 = vst.msk [vmem:[%s149 + $0x48] sm:$0xff] %vm324, %v385
        %402 = vst.msk [vmem:[%s149 + $0x50] sm:$0xff] %vm324, %v386
        %403 = vst.msk [vmem:[%s149 + $0x58] sm:$0xff] %vm324, %v387
        %404 = vst.msk [vmem:[%s149 + $0x60] sm:$0xff] %vm324, %v388
        %405 = vst.msk [vmem:[%s149 + $0x68] sm:$0xff] %vm324, %v389
        %406 = vst.msk [vmem:[%s149 + $0x70] sm:$0xff] %vm324, %v390
        %407 = vst.msk [vmem:[%s149 + $0x78] sm:$0xff] %vm324, %v391
      $region32: #{dense_gcn_forward.7} parent=23 // pred_fallthru
        _
      %s408 = smul.u32 16, %s16
      %p409 = scmp.lt.s32.totalorder %s408, 31
      %s410 = scalar_select %p409, %s408, 31
      %s411 = smul.addr %s410, 8
      %s412 = scalar_lea.vmem %s1, %s411
      // Predicated region
      $region33: #{dense_gcn_forward.7} parent=23 // pred_check
        %p413 = pneg %p70
      $region34: #{dense_gcn_forward.7} parent=23 // pred_check_branch
        %415 = sbr.rel (%p413) target = $region36
      $region35: #{dense_gcn_forward.7} parent=23 // pred_region
        %s416 = smul.u32 16, %s16
      $region36: #{dense_gcn_forward.7} parent=23 // pred_fallthru
        _
    $region24: #{dense_gcn_forward.7} parent=5 // pred_fallthru
      _
    %p417 = scmp.le.s32.totalorder 2, %s7
    // Predicated region
    $region37: #{dense_gcn_forward.7} parent=5 // pred_check
      %p418 = pneg %p417
    $region38: #{dense_gcn_forward.7} parent=5 // pred_check_branch
      %420 = sbr.rel (%p418) target = $region40
    $region39: #{dense_gcn_forward.7} parent=5 // pred_region
      %s421 = ssub.s32 %s7, 2
      // Predicated region
      $region41: #{dense_gcn_forward.7} parent=39 // pred_check
        %p422 = pneg %p76
      $region42: #{dense_gcn_forward.7} parent=39 // pred_check_branch
        %424 = sbr.rel (%p422) target = $region44
      $region43: #{dense_gcn_forward.7} parent=39 // pred_region
        %s425 = smul.u32 16, %s18
        %p426 = scmp.lt.s32.totalorder %s425, 31
        %s427 = scalar_select %p426, %s425, 31
        %s428 = smul.addr %s427, 8
        %s429 = scalar_lea.vmem %s1, %s428
      $region44: #{dense_gcn_forward.7} parent=39 // pred_fallthru
        _
    $region40: #{dense_gcn_forward.7} parent=5 // pred_fallthru
      _
  $region6: #{dense_gcn_forward.7} parent=0 // loop_footer
    %s11 = sadd.s32 1, %s7
  $region7: #{dense_gcn_forward.7} parent=0 // loop_footer_branch
    %6 = sbr.rel target = $region3
  $region8: #{dense_gcn_forward.7} parent=0 // loop_exit
    _

// kernel: dense_gcn_forward.8
$region0: #{dense_gcn_forward.8}
  #allocation0 [shape = 'u32[]', space=smem, size = 0x4, offset = 0x4, fixed_abs, tag = 'smem constant byte address 0x4 - core index']
  #allocation1 [shape = 'u32[144,128]{1,0:T(1,128)}', space=vmem, size = 0x12000, scoped, tag = 'internal scratch']
  %s0 = inlined_call_operand.vmem [shape: f32[256,128], index: 0, kind: input, shape index: {}]
  %s1 = inlined_call_operand.vmem [shape: f32[256,1], index: 1, kind: input, shape index: {}]
  %s2 = inlined_call_operand.vmem [shape: bf16[128,128], index: 2, kind: input, shape index: {}]
  %s3 = inlined_call_operand.vmem [shape: bf16[256,128], index: 3, kind: output, shape index: {}]
  %s4 = sld [smem:[#allocation0]]
  $region22: #{dense_gcn_forward.8} parent=0
    _
  %s6 = ssub.s32 1, %s4
  %s7 = scalar_select 0, %s6, %s4
  // Predicated region
  $region2: #{dense_gcn_forward.8} parent=0 // pred_check
    _
  $region3: #{dense_gcn_forward.8} parent=0 // pred_check_branch
    %9 = sbr.rel (0) target = $region5
  $region4: #{dense_gcn_forward.8} parent=0 // pred_region
    _
  $region5: #{dense_gcn_forward.8} parent=0 // pred_fallthru
    _
  // Predicated region
  $region6: #{dense_gcn_forward.8} parent=0 // pred_check
    _
  $region7: #{dense_gcn_forward.8} parent=0 // pred_check_branch
    %11 = sbr.rel (0) target = $region9
  $region8: #{dense_gcn_forward.8} parent=0 // pred_region
    _
  $region9: #{dense_gcn_forward.8} parent=0 // pred_fallthru
    _
  // Predicated region
  $region10: #{dense_gcn_forward.8} parent=0 // pred_check
    _
  $region11: #{dense_gcn_forward.8} parent=0 // pred_check_branch
    %13 = sbr.rel (0) target = $region13
  $region12: #{dense_gcn_forward.8} parent=0 // pred_region
    _
  $region13: #{dense_gcn_forward.8} parent=0 // pred_fallthru
    _
  %v15 = vld [vmem:[%s0] sm:$0xff]
  %v16 = vld [vmem:[%s0 + $0x8] sm:$0xff]
  %v17 = vld [vmem:[%s0 + $0x10] sm:$0xff]
  %v18 = vld [vmem:[%s0 + $0x18] sm:$0xff]
  %v19 = vld [vmem:[%s0 + $0x20] sm:$0xff]
  %v20 = vld [vmem:[%s0 + $0x28] sm:$0xff]
  %v21 = vld [vmem:[%s0 + $0x30] sm:$0xff]
  %v22 = vld [vmem:[%s0 + $0x38] sm:$0xff]
  %v23 = vld [vmem:[%s0 + $0x40] sm:$0xff]
  %v24 = vld [vmem:[%s0 + $0x48] sm:$0xff]
  %v25 = vld [vmem:[%s0 + $0x50] sm:$0xff]
  %v26 = vld [vmem:[%s0 + $0x58] sm:$0xff]
  %v27 = vld [vmem:[%s0 + $0x60] sm:$0xff]
  %v28 = vld [vmem:[%s0 + $0x68] sm:$0xff]
  %v29 = vld [vmem:[%s0 + $0x70] sm:$0xff]
  %v30 = vld [vmem:[%s0 + $0x78] sm:$0xff]
  %v31 = vld [vmem:[%s0 + $0x80] sm:$0xff]
  %v32 = vld [vmem:[%s0 + $0x88] sm:$0xff]
  %v33 = vld [vmem:[%s0 + $0x90] sm:$0xff]
  %v34 = vld [vmem:[%s0 + $0x98] sm:$0xff]
  %v35 = vld [vmem:[%s0 + $0xa0] sm:$0xff]
  %v36 = vld [vmem:[%s0 + $0xa8] sm:$0xff]
  %v37 = vld [vmem:[%s0 + $0xb0] sm:$0xff]
  %v38 = vld [vmem:[%s0 + $0xb8] sm:$0xff]
  %v39 = vld [vmem:[%s0 + $0xc0] sm:$0xff]
  %v40 = vld [vmem:[%s0 + $0xc8] sm:$0xff]
  %v41 = vld [vmem:[%s0 + $0xd0] sm:$0xff]
  %v42 = vld [vmem:[%s0 + $0xd8] sm:$0xff]
  %v43 = vld [vmem:[%s0 + $0xe0] sm:$0xff]
  %v44 = vld [vmem:[%s0 + $0xe8] sm:$0xff]
  %v45 = vld [vmem:[%s0 + $0xf0] sm:$0xff]
  %v46 = vld [vmem:[%s0 + $0xf8] sm:$0xff]
  %v47 = vld [vmem:[%s1] sm:$0xff]
  %v48 = vld [vmem:[%s1 + $0x8] sm:$0xff]
  %v49 = vld [vmem:[%s1 + $0x10] sm:$0xff]
  %v50 = vld [vmem:[%s1 + $0x18] sm:$0xff]
  %v51 = vld [vmem:[%s1 + $0x20] sm:$0xff]
  %v52 = vld [vmem:[%s1 + $0x28] sm:$0xff]
  %v53 = vld [vmem:[%s1 + $0x30] sm:$0xff]
  %v54 = vld [vmem:[%s1 + $0x38] sm:$0xff]
  %v55 = vld [vmem:[%s1 + $0x40] sm:$0xff]
  %v56 = vld [vmem:[%s1 + $0x48] sm:$0xff]
  %v57 = vld [vmem:[%s1 + $0x50] sm:$0xff]
  %v58 = vld [vmem:[%s1 + $0x58] sm:$0xff]
  %v59 = vld [vmem:[%s1 + $0x60] sm:$0xff]
  %v60 = vld [vmem:[%s1 + $0x68] sm:$0xff]
  %v61 = vld [vmem:[%s1 + $0x70] sm:$0xff]
  %v62 = vld [vmem:[%s1 + $0x78] sm:$0xff]
  %v63 = vld [vmem:[%s1 + $0x80] sm:$0xff]
  %v64 = vld [vmem:[%s1 + $0x88] sm:$0xff]
  %v65 = vld [vmem:[%s1 + $0x90] sm:$0xff]
  %v66 = vld [vmem:[%s1 + $0x98] sm:$0xff]
  %v67 = vld [vmem:[%s1 + $0xa0] sm:$0xff]
  %v68 = vld [vmem:[%s1 + $0xa8] sm:$0xff]
  %v69 = vld [vmem:[%s1 + $0xb0] sm:$0xff]
  %v70 = vld [vmem:[%s1 + $0xb8] sm:$0xff]
  %v71 = vld [vmem:[%s1 + $0xc0] sm:$0xff]
  %v72 = vld [vmem:[%s1 + $0xc8] sm:$0xff]
  %v73 = vld [vmem:[%s1 + $0xd0] sm:$0xff]
  %v74 = vld [vmem:[%s1 + $0xd8] sm:$0xff]
  %v75 = vld [vmem:[%s1 + $0xe0] sm:$0xff]
  %v76 = vld [vmem:[%s1 + $0xe8] sm:$0xff]
  %v77 = vld [vmem:[%s1 + $0xf0] sm:$0xff]
  %v78 = vld [vmem:[%s1 + $0xf8] sm:$0xff]
  %80 = vset.pattern.permute.xlu0 0
  %81 = vperm.xlu0 %80, %v47
  %v82 = vpop.permute.xlu0 %81
  %85 = vset.pattern.permute.xlu0 0
  %86 = vperm.xlu0 %85, %v48
  %v87 = vpop.permute.xlu0 %86
  %90 = vset.pattern.permute.xlu0 0
  %91 = vperm.xlu0 %90, %v49
  %v92 = vpop.permute.xlu0 %91
  %95 = vset.pattern.permute.xlu0 0
  %96 = vperm.xlu0 %95, %v50
  %v97 = vpop.permute.xlu0 %96
  %100 = vset.pattern.permute.xlu0 0
  %101 = vperm.xlu0 %100, %v51
  %v102 = vpop.permute.xlu0 %101
  %105 = vset.pattern.permute.xlu0 0
  %106 = vperm.xlu0 %105, %v52
  %v107 = vpop.permute.xlu0 %106
  %110 = vset.pattern.permute.xlu0 0
  %111 = vperm.xlu0 %110, %v53
  %v112 = vpop.permute.xlu0 %111
  %115 = vset.pattern.permute.xlu0 0
  %116 = vperm.xlu0 %115, %v54
  %v117 = vpop.permute.xlu0 %116
  %120 = vset.pattern.permute.xlu0 0
  %121 = vperm.xlu0 %120, %v55
  %v122 = vpop.permute.xlu0 %121
  %125 = vset.pattern.permute.xlu0 0
  %126 = vperm.xlu0 %125, %v56
  %v127 = vpop.permute.xlu0 %126
  %130 = vset.pattern.permute.xlu0 0
  %131 = vperm.xlu0 %130, %v57
  %v132 = vpop.permute.xlu0 %131
  %135 = vset.pattern.permute.xlu0 0
  %136 = vperm.xlu0 %135, %v58
  %v137 = vpop.permute.xlu0 %136
  %140 = vset.pattern.permute.xlu0 0
  %141 = vperm.xlu0 %140, %v59
  %v142 = vpop.permute.xlu0 %141
  %145 = vset.pattern.permute.xlu0 0
  %146 = vperm.xlu0 %145, %v60
  %v147 = vpop.permute.xlu0 %146
  %150 = vset.pattern.permute.xlu0 0
  %151 = vperm.xlu0 %150, %v61
  %v152 = vpop.permute.xlu0 %151
  %155 = vset.pattern.permute.xlu0 0
  %156 = vperm.xlu0 %155, %v62
  %v157 = vpop.permute.xlu0 %156
  %160 = vset.pattern.permute.xlu0 0
  %161 = vperm.xlu0 %160, %v63
  %v162 = vpop.permute.xlu0 %161
  %165 = vset.pattern.permute.xlu0 0
  %166 = vperm.xlu0 %165, %v64
  %v167 = vpop.permute.xlu0 %166
  %170 = vset.pattern.permute.xlu0 0
  %171 = vperm.xlu0 %170, %v65
  %v172 = vpop.permute.xlu0 %171
  %175 = vset.pattern.permute.xlu0 0
  %176 = vperm.xlu0 %175, %v66
  %v177 = vpop.permute.xlu0 %176
  %180 = vset.pattern.permute.xlu0 0
  %181 = vperm.xlu0 %180, %v67
  %v182 = vpop.permute.xlu0 %181
  %185 = vset.pattern.permute.xlu0 0
  %186 = vperm.xlu0 %185, %v68
  %v187 = vpop.permute.xlu0 %186
  %190 = vset.pattern.permute.xlu0 0
  %191 = vperm.xlu0 %190, %v69
  %v192 = vpop.permute.xlu0 %191
  %195 = vset.pattern.permute.xlu0 0
  %196 = vperm.xlu0 %195, %v70
  %v197 = vpop.permute.xlu0 %196
  %200 = vset.pattern.permute.xlu0 0
  %201 = vperm.xlu0 %200, %v71
  %v202 = vpop.permute.xlu0 %201
  %205 = vset.pattern.permute.xlu0 0
  %206 = vperm.xlu0 %205, %v72
  %v207 = vpop.permute.xlu0 %206
  %210 = vset.pattern.permute.xlu0 0
  %211 = vperm.xlu0 %210, %v73
  %v212 = vpop.permute.xlu0 %211
  %215 = vset.pattern.permute.xlu0 0
  %216 = vperm.xlu0 %215, %v74
  %v217 = vpop.permute.xlu0 %216
  %220 = vset.pattern.permute.xlu0 0
  %221 = vperm.xlu0 %220, %v75
  %v222 = vpop.permute.xlu0 %221
  %225 = vset.pattern.permute.xlu0 0
  %226 = vperm.xlu0 %225, %v76
  %v227 = vpop.permute.xlu0 %226
  %230 = vset.pattern.permute.xlu0 0
  %231 = vperm.xlu0 %230, %v77
  %v232 = vpop.permute.xlu0 %231
  %235 = vset.pattern.permute.xlu0 0
  %236 = vperm.xlu0 %235, %v78
  %v237 = vpop.permute.xlu0 %236
  %v239 = vmul.f32 %v15, %v82
  %v240 = vmul.f32 %v16, %v87
  %v241 = vmul.f32 %v17, %v92
  %v242 = vmul.f32 %v18, %v97
  %v243 = vmul.f32 %v19, %v102
  %v244 = vmul.f32 %v20, %v107
  %v245 = vmul.f32 %v21, %v112
  %v246 = vmul.f32 %v22, %v117
  %v247 = vmul.f32 %v23, %v122
  %v248 = vmul.f32 %v24, %v127
  %v249 = vmul.f32 %v25, %v132
  %v250 = vmul.f32 %v26, %v137
  %v251 = vmul.f32 %v27, %v142
  %v252 = vmul.f32 %v28, %v147
  %v253 = vmul.f32 %v29, %v152
  %v254 = vmul.f32 %v30, %v157
  %v255 = vmul.f32 %v31, %v162
  %v256 = vmul.f32 %v32, %v167
  %v257 = vmul.f32 %v33, %v172
  %v258 = vmul.f32 %v34, %v177
  %v259 = vmul.f32 %v35, %v182
  %v260 = vmul.f32 %v36, %v187
  %v261 = vmul.f32 %v37, %v192
  %v262 = vmul.f32 %v38, %v197
  %v263 = vmul.f32 %v39, %v202
  %v264 = vmul.f32 %v40, %v207
  %v265 = vmul.f32 %v41, %v212
  %v266 = vmul.f32 %v42, %v217
  %v267 = vmul.f32 %v43, %v222
  %v268 = vmul.f32 %v44, %v227
  %v269 = vmul.f32 %v45, %v232
  %v270 = vmul.f32 %v46, %v237
  %v271 = vpack.c.bf16 %v240, %v239
  %v272 = vpack.c.bf16 %v242, %v241
  %v273 = vpack.c.bf16 %v244, %v243
  %v274 = vpack.c.bf16 %v246, %v245
  %v275 = vpack.c.bf16 %v248, %v247
  %v276 = vpack.c.bf16 %v250, %v249
  %v277 = vpack.c.bf16 %v252, %v251
  %v278 = vpack.c.bf16 %v254, %v253
  %v279 = vpack.c.bf16 %v256, %v255
  %v280 = vpack.c.bf16 %v258, %v257
  %v281 = vpack.c.bf16 %v260, %v259
  %v282 = vpack.c.bf16 %v262, %v261
  %v283 = vpack.c.bf16 %v264, %v263
  %v284 = vpack.c.bf16 %v266, %v265
  %v285 = vpack.c.bf16 %v268, %v267
  %v286 = vpack.c.bf16 %v270, %v269
  %v287 = vld [vmem:[%s2] sm:$0xf]
  %v288 = vld [vmem:[%s2 + $0x4] sm:$0xf]
  %v289 = vld [vmem:[%s2 + $0x8] sm:$0xf]
  %v290 = vld [vmem:[%s2 + $0xc] sm:$0xf]
  %v291 = vld [vmem:[%s2 + $0x10] sm:$0xf]
  %v292 = vld [vmem:[%s2 + $0x14] sm:$0xf]
  %v293 = vld [vmem:[%s2 + $0x18] sm:$0xf]
  %v294 = vld [vmem:[%s2 + $0x1c] sm:$0xf]
  %v295 = vld [vmem:[%s2 + $0x20] sm:$0xf]
  %v296 = vld [vmem:[%s2 + $0x24] sm:$0xf]
  %v297 = vld [vmem:[%s2 + $0x28] sm:$0xf]
  %v298 = vld [vmem:[%s2 + $0x2c] sm:$0xf]
  %v299 = vld [vmem:[%s2 + $0x30] sm:$0xf]
  %v300 = vld [vmem:[%s2 + $0x34] sm:$0xf]
  %v301 = vld [vmem:[%s2 + $0x38] sm:$0xf]
  %v302 = vld [vmem:[%s2 + $0x3c] sm:$0xf]
  %v319 = vunpack.c.l.b16 %v287
  %v320 = vunpack.c.l.b16 %v288
  %v321 = vunpack.c.l.b16 %v289
  %v322 = vunpack.c.l.b16 %v290
  %v323 = vunpack.c.l.b16 %v291
  %v324 = vunpack.c.l.b16 %v292
  %v325 = vunpack.c.l.b16 %v293
  %v326 = vunpack.c.l.b16 %v294
  %v327 = vunpack.c.l.b16 %v295
  %v328 = vunpack.c.l.b16 %v296
  %v329 = vunpack.c.l.b16 %v297
  %v330 = vunpack.c.l.b16 %v298
  %v331 = vunpack.c.l.b16 %v299
  %v332 = vunpack.c.l.b16 %v300
  %v333 = vunpack.c.l.b16 %v301
  %v334 = vunpack.c.l.b16 %v302
  %v335 = vpack.c.b16 %v320, %v319
  %v336 = vpack.c.b16 %v322, %v321
  %v337 = vpack.c.b16 %v324, %v323
  %v338 = vpack.c.b16 %v326, %v325
  %v339 = vpack.c.b16 %v328, %v327
  %v340 = vpack.c.b16 %v330, %v329
  %v341 = vpack.c.b16 %v332, %v331
  %v342 = vpack.c.b16 %v334, %v333
  %351 = vmatprep.subr.bf16.mxu0 0
  %352 = vmatpush1.bf16.msra.mxu0 %v335
  %353 = vmatprep.subr.bf16.mxu0 0
  %354 = vmatpush1.bf16.msra.mxu0 %v336
  %355 = vmatprep.subr.bf16.mxu0 0
  %356 = vmatpush1.bf16.msra.mxu0 %v337
  %357 = vmatprep.subr.bf16.mxu0 0
  %358 = vmatpush1.bf16.msra.mxu0 %v338
  %359 = vmatprep.subr.bf16.mxu0 0
  %360 = vmatpush1.bf16.msra.mxu0 %v339
  %361 = vmatprep.subr.bf16.mxu0 0
  %362 = vmatpush1.bf16.msra.mxu0 %v340
  %363 = vmatprep.subr.bf16.mxu0 0
  %364 = vmatpush1.bf16.msra.mxu0 %v341
  %365 = vmatprep.subr.bf16.mxu0 0
  %366 = vmatpush1.bf16.msra.mxu0 %v342
  %367 = vmatprep.subr.bf16.mxu0 0
  %368 = vmatpush1.bf16.msra.mxu0 0
  %369 = vmatprep.subr.bf16.mxu0 0
  %370 = vmatpush1.bf16.msra.mxu0 0
  %371 = vmatprep.subr.bf16.mxu0 0
  %372 = vmatpush1.bf16.msra.mxu0 0
  %373 = vmatprep.subr.bf16.mxu0 0
  %374 = vmatpush1.bf16.msra.mxu0 0
  %375 = vmatprep.subr.bf16.mxu0 0
  %376 = vmatpush1.bf16.msra.mxu0 0
  %377 = vmatprep.subr.bf16.mxu0 0
  %378 = vmatpush1.bf16.msra.mxu0 0
  %379 = vmatprep.subr.bf16.mxu0 0
  %380 = vmatpush1.bf16.msra.mxu0 0
  %381 = vmatprep.subr.bf16.mxu0 0
  %382 = vmatpush1.bf16.msra.mxu0 0
  %383 = vmatprep.mubr.bf16.mxu0 0
  %384 = vmatmul.mubr.bf16.gmra.mrb[0].mxu0 %v271
  %v385 = vpop.f32.mrb[0].mxu0
  %v386 = vadd.f32 0.0, %v385
  %v387 = vpop.f32.mrb[0].mxu0
  %v388 = vpop.f32.mrb[0].mxu0
  %v389 = vadd.f32 0.0, %v388
  %v390 = vpop.f32.mrb[0].mxu0
  %391 = vmatprep.mubr.bf16.mxu0 0
  %392 = vmatmul.mubr.bf16.gmra.mrb[0].mxu0 %v272
  %v393 = vpop.f32.mrb[0].mxu0
  %v394 = vadd.f32 0.0, %v393
  %v395 = vpop.f32.mrb[0].mxu0
  %v396 = vpop.f32.mrb[0].mxu0
  %v397 = vadd.f32 0.0, %v396
  %v398 = vpop.f32.mrb[0].mxu0
  %399 = vmatprep.mubr.bf16.mxu0 0
  %400 = vmatmul.mubr.bf16.gmra.mrb[0].mxu0 %v273
  %v401 = vpop.f32.mrb[0].mxu0
  %v402 = vadd.f32 0.0, %v401
  %v403 = vpop.f32.mrb[0].mxu0
  %v404 = vpop.f32.mrb[0].mxu0
  %v405 = vadd.f32 0.0, %v404
  %v406 = vpop.f32.mrb[0].mxu0
  %407 = vmatprep.mubr.bf16.mxu0 0
  %408 = vmatmul.mubr.bf16.gmra.mrb[0].mxu0 %v274
  %v409 = vpop.f32.mrb[0].mxu0
  %v410 = vadd.f32 0.0, %v409
  %v411 = vpop.f32.mrb[0].mxu0
  %v412 = vpop.f32.mrb[0].mxu0
  %v413 = vadd.f32 0.0, %v412
  %v414 = vpop.f32.mrb[0].mxu0
  %415 = vmatprep.mubr.bf16.mxu0 0
  %416 = vmatmul.mubr.bf16.gmra.mrb[0].mxu0 %v275
  %v417 = vpop.f32.mrb[0].mxu0
  %v418 = vadd.f32 0.0, %v417
  %v419 = vpop.f32.mrb[0].mxu0
  %v420 = vpop.f32.mrb[0].mxu0
  %v421 = vadd.f32 0.0, %v420
  %v422 = vpop.f32.mrb[0].mxu0
  %423 = vmatprep.mubr.bf16.mxu0 0
  %424 = vmatmul.mubr.bf16.gmra.mrb[0].mxu0 %v276
  %v425 = vpop.f32.mrb[0].mxu0
  %v426 = vadd.f32 0.0, %v425
  %v427 = vpop.f32.mrb[0].mxu0
  %v428 = vpop.f32.mrb[0].mxu0
  %v429 = vadd.f32 0.0, %v428
  %v430 = vpop.f32.mrb[0].mxu0
  %431 = vmatprep.mubr.bf16.mxu0 0
  %432 = vmatmul.mubr.bf16.gmra.mrb[0].mxu0 %v277
  %v433 = vpop.f32.mrb[0].mxu0
  %v434 = vadd.f32 0.0, %v433
  %v435 = vpop.f32.mrb[0].mxu0
  %v436 = vpop.f32.mrb[0].mxu0
  %v437 = vadd.f32 0.0, %v436
  %v438 = vpop.f32.mrb[0].mxu0
  %439 = vmatprep.mubr.bf16.mxu0 0
  %440 = vmatmul.mubr.bf16.gmra.mrb[0].mxu0 %v278
  %v441 = vpop.f32.mrb[0].mxu0
  %v442 = vadd.f32 0.0, %v441
  %v443 = vpop.f32.mrb[0].mxu0
  %v444 = vpop.f32.mrb[0].mxu0
  %v445 = vadd.f32 0.0, %v444
  %v446 = vpop.f32.mrb[0].mxu0
  %447 = vmatprep.mubr.bf16.mxu0 0
  %448 = vmatmul.mubr.bf16.gmra.mrb[0].mxu0 %v279
  %v449 = vpop.f32.mrb[0].mxu0
  %v450 = vadd.f32 0.0, %v449
  %v451 = vpop.f32.mrb[0].mxu0
  %v452 = vpop.f32.mrb[0].mxu0
  %v453 = vadd.f32 0.0, %v452
  %v454 = vpop.f32.mrb[0].mxu0
  %455 = vmatprep.mubr.bf16.mxu0 0
  %456 = vmatmul.mubr.bf16.gmra.mrb[0].mxu0 %v280
  %v457 = vpop.f32.mrb[0].mxu0
  %v458 = vadd.f32 0.0, %v457
  %v459 = vpop.f32.mrb[0].mxu0
  %v460 = vpop.f32.mrb[0].mxu0
  %v461 = vadd.f32 0.0, %v460
  %v462 = vpop.f32.mrb[0].mxu0
  %463 = vmatprep.mubr.bf16.mxu0 0
  %464 = vmatmul.mubr.bf16.gmra.mrb[0].mxu0 %v281
  %v465 = vpop.f32.mrb[0].mxu0
  %v466 = vadd.f32 0.0, %v465
  %v467 = vpop.f32.mrb[0].mxu0
  %v468 = vpop.f32.mrb[0].mxu0
  %v469 = vadd.f32 0.0, %v468
  %v470 = vpop.f32.mrb[0].mxu0
  %471 = vmatprep.mubr.bf16.mxu0 0
  %472 = vmatmul.mubr.bf16.gmra.mrb[0].mxu0 %v282
  %v473 = vpop.f32.mrb[0].mxu0
  %v474 = vadd.f32 0.0, %v473
  %v475 = vpop.f32.mrb[0].mxu0
  %v476 = vpop.f32.mrb[0].mxu0
  %v477 = vadd.f32 0.0, %v476
  %v478 = vpop.f32.mrb[0].mxu0
  %479 = vmatprep.mubr.bf16.mxu0 0
  %480 = vmatmul.mubr.bf16.gmra.mrb[0].mxu0 %v283
  %v481 = vpop.f32.mrb[0].mxu0
  %v482 = vadd.f32 0.0, %v481
  %v483 = vpop.f32.mrb[0].mxu0
  %v484 = vpop.f32.mrb[0].mxu0
  %v485 = vadd.f32 0.0, %v484
  %v486 = vpop.f32.mrb[0].mxu0
  %487 = vmatprep.mubr.bf16.mxu0 0
  %488 = vmatmul.mubr.bf16.gmra.mrb[0].mxu0 %v284
  %v489 = vpop.f32.mrb[0].mxu0
  %v490 = vadd.f32 0.0, %v489
  %v491 = vpop.f32.mrb[0].mxu0
  %v492 = vpop.f32.mrb[0].mxu0
  %v493 = vadd.f32 0.0, %v492
  %v494 = vpop.f32.mrb[0].mxu0
  %495 = vmatprep.mubr.bf16.mxu0 0
  %496 = vmatmul.mubr.bf16.gmra.mrb[0].mxu0 %v285
  %v497 = vpop.f32.mrb[0].mxu0
  %v498 = vadd.f32 0.0, %v497
  %v499 = vpop.f32.mrb[0].mxu0
  %v500 = vpop.f32.mrb[0].mxu0
  %v501 = vadd.f32 0.0, %v500
  %v502 = vpop.f32.mrb[0].mxu0
  %503 = vmatprep.mubr.bf16.mxu0 0
  %504 = vmatmul.mubr.bf16.gmra.mrb[0].mxu0 %v286
  %v505 = vpop.f32.mrb[0].mxu0
  %v506 = vadd.f32 0.0, %v505
  %v507 = vpop.f32.mrb[0].mxu0
  %v508 = vpop.f32.mrb[0].mxu0
  %v509 = vadd.f32 0.0, %v508
  %v510 = vpop.f32.mrb[0].mxu0
  %511 = vdwg.mxu0
  %v512 = vpack.c.bf16 %v389, %v386
  %v513 = vpack.c.bf16 %v397, %v394
  %v514 = vpack.c.bf16 %v405, %v402
  %v515 = vpack.c.bf16 %v413, %v410
  %v516 = vpack.c.bf16 %v421, %v418
  %v517 = vpack.c.bf16 %v429, %v426
  %v518 = vpack.c.bf16 %v437, %v434
  %v519 = vpack.c.bf16 %v445, %v442
  %v520 = vpack.c.bf16 %v453, %v450
  %v521 = vpack.c.bf16 %v461, %v458
  %v522 = vpack.c.bf16 %v469, %v466
  %v523 = vpack.c.bf16 %v477, %v474
  %v524 = vpack.c.bf16 %v485, %v482
  %v525 = vpack.c.bf16 %v493, %v490
  %v526 = vpack.c.bf16 %v501, %v498
  %v527 = vpack.c.bf16 %v509, %v506
  %v544 = vunpack.c.l.b16 %v512
  %v545 = vunpack.c.h.b16 %v512
  %v546 = vunpack.c.l.b16 %v513
  %v547 = vunpack.c.h.b16 %v513
  %v548 = vunpack.c.l.b16 %v514
  %v549 = vunpack.c.h.b16 %v514
  %v550 = vunpack.c.l.b16 %v515
  %v551 = vunpack.c.h.b16 %v515
  %v552 = vunpack.c.l.b16 %v516
  %v553 = vunpack.c.h.b16 %v516
  %v554 = vunpack.c.l.b16 %v517
  %v555 = vunpack.c.h.b16 %v517
  %v556 = vunpack.c.l.b16 %v518
  %v557 = vunpack.c.h.b16 %v518
  %v558 = vunpack.c.l.b16 %v519
  %v559 = vunpack.c.h.b16 %v519
  %v560 = vunpack.c.l.b16 %v520
  %v561 = vunpack.c.h.b16 %v520
  %v562 = vunpack.c.l.b16 %v521
  %v563 = vunpack.c.h.b16 %v521
  %v564 = vunpack.c.l.b16 %v522
  %v565 = vunpack.c.h.b16 %v522
  %v566 = vunpack.c.l.b16 %v523
  %v567 = vunpack.c.h.b16 %v523
  %v568 = vunpack.c.l.b16 %v524
  %v569 = vunpack.c.h.b16 %v524
  %v570 = vunpack.c.l.b16 %v525
  %v571 = vunpack.c.h.b16 %v525
  %v572 = vunpack.c.l.b16 %v526
  %v573 = vunpack.c.h.b16 %v526
  %v574 = vunpack.c.l.b16 %v527
  %v575 = vunpack.c.h.b16 %v527
  %v576 = vpack.c.b16 %v544, %v544
  %v577 = vpack.c.b16 %v545, %v545
  %v578 = vpack.c.b16 %v546, %v546
  %v579 = vpack.c.b16 %v547, %v547
  %v580 = vpack.c.b16 %v548, %v548
  %v581 = vpack.c.b16 %v549, %v549
  %v582 = vpack.c.b16 %v550, %v550
  %v583 = vpack.c.b16 %v551, %v551
  %v584 = vpack.c.b16 %v552, %v552
  %v585 = vpack.c.b16 %v553, %v553
  %v586 = vpack.c.b16 %v554, %v554
  %v587 = vpack.c.b16 %v555, %v555
  %v588 = vpack.c.b16 %v556, %v556
  %v589 = vpack.c.b16 %v557, %v557
  %v590 = vpack.c.b16 %v558, %v558
  %v591 = vpack.c.b16 %v559, %v559
  %v592 = vpack.c.b16 %v560, %v560
  %v593 = vpack.c.b16 %v561, %v561
  %v594 = vpack.c.b16 %v562, %v562
  %v595 = vpack.c.b16 %v563, %v563
  %v596 = vpack.c.b16 %v564, %v564
  %v597 = vpack.c.b16 %v565, %v565
  %v598 = vpack.c.b16 %v566, %v566
  %v599 = vpack.c.b16 %v567, %v567
  %v600 = vpack.c.b16 %v568, %v568
  %v601 = vpack.c.b16 %v569, %v569
  %v602 = vpack.c.b16 %v570, %v570
  %v603 = vpack.c.b16 %v571, %v571
  %v604 = vpack.c.b16 %v572, %v572
  %v605 = vpack.c.b16 %v573, %v573
  %v606 = vpack.c.b16 %v574, %v574
  %v607 = vpack.c.b16 %v575, %v575
  %640 = vst [vmem:[%s3] sm:$0xf] %v576
  %641 = vst [vmem:[%s3 + $0x4] sm:$0xf] %v577
  %642 = vst [vmem:[%s3 + $0x8] sm:$0xf] %v578
  %643 = vst [vmem:[%s3 + $0xc] sm:$0xf] %v579
  %644 = vst [vmem:[%s3 + $0x10] sm:$0xf] %v580
  %645 = vst [vmem:[%s3 + $0x14] sm:$0xf] %v581
  %646 = vst [vmem:[%s3 + $0x18] sm:$0xf] %v582
  %647 = vst [vmem:[%s3 + $0x1c] sm:$0xf] %v583
  %648 = vst [vmem:[%s3 + $0x20] sm:$0xf] %v584
  %649 = vst [vmem:[%s3 + $0x24] sm:$0xf] %v585
  %650 = vst [vmem:[%s3 + $0x28] sm:$0xf] %v586
  %651 = vst [vmem:[%s3 + $0x2c] sm:$0xf] %v587
  %652 = vst [vmem:[%s3 + $0x30] sm:$0xf] %v588
  %653 = vst [vmem:[%s3 + $0x34] sm:$0xf] %v589
  %654 = vst [vmem:[%s3 + $0x38] sm:$0xf] %v590
  %655 = vst [vmem:[%s3 + $0x3c] sm:$0xf] %v591
  %656 = vst [vmem:[%s3 + $0x40] sm:$0xf] %v592
  %657 = vst [vmem:[%s3 + $0x44] sm:$0xf] %v593
  %658 = vst [vmem:[%s3 + $0x48] sm:$0xf] %v594
  %659 = vst [vmem:[%s3 + $0x4c] sm:$0xf] %v595
  %660 = vst [vmem:[%s3 + $0x50] sm:$0xf] %v596
  %661 = vst [vmem:[%s3 + $0x54] sm:$0xf] %v597
  %662 = vst [vmem:[%s3 + $0x58] sm:$0xf] %v598
  %663 = vst [vmem:[%s3 + $0x5c] sm:$0xf] %v599
  %664 = vst [vmem:[%s3 + $0x60] sm:$0xf] %v600
  %665 = vst [vmem:[%s3 + $0x64] sm:$0xf] %v601
  %666 = vst [vmem:[%s3 + $0x68] sm:$0xf] %v602
  %667 = vst [vmem:[%s3 + $0x6c] sm:$0xf] %v603
  %668 = vst [vmem:[%s3 + $0x70] sm:$0xf] %v604
  %669 = vst [vmem:[%s3 + $0x74] sm:$0xf] %v605
  %670 = vst [vmem:[%s3 + $0x78] sm:$0xf] %v606
  %671 = vst [vmem:[%s3 + $0x7c] sm:$0xf] %v607
  // Predicated region
  $region14: #{dense_gcn_forward.8} parent=0 // pred_check
    _
  $region15: #{dense_gcn_forward.8} parent=0 // pred_check_branch
    %673 = sbr.rel (0) target = $region17
  $region16: #{dense_gcn_forward.8} parent=0 // pred_region
    _
  $region17: #{dense_gcn_forward.8} parent=0 // pred_fallthru
    _
  // Predicated region
  $region18: #{dense_gcn_forward.8} parent=0 // pred_check
    _
  $region19: #{dense_gcn_forward.8} parent=0 // pred_check_branch
    %675 = sbr.rel (0) target = $region21
  $region20: #{dense_gcn_forward.8} parent=0 // pred_region
    _
  $region21: #{dense_gcn_forward.8} parent=0 // pred_fallthru
    _

// kernel: dense_gcn_forward.9
$region0: #{dense_gcn_forward.9}
  #allocation0 [shape = 'u32[]', space=smem, size = 0x4, offset = 0x4, fixed_abs, tag = 'smem constant byte address 0x4 - core index']
  #allocation1 [shape = 'u32[144,128]{1,0:T(1,128)}', space=vmem, size = 0x12000, scoped, tag = 'internal scratch']
  #allocation2 [shape = 'f32[128,128]{1,0:T(8,128)}', space=vmem, size = 0x10000, scoped, tag = 'scratch operand']
  %s0 = inlined_call_operand.vmem [shape: s8[256,256], index: 0, kind: input, shape index: {}]
  %s1 = inlined_call_operand.vmem [shape: bf16[256,128], index: 1, kind: input, shape index: {}]
  %s2 = inlined_call_operand.vmem [shape: f32[1,128], index: 2, kind: input, shape index: {}]
  %s3 = inlined_call_operand.vmem [shape: f32[256,1], index: 3, kind: input, shape index: {}]
  %s4 = inlined_call_operand.vmem [shape: bf16[256,128], index: 4, kind: output, shape index: {}]
  %s5 = sld [smem:[#allocation0]]
  $region57: #{dense_gcn_forward.9} parent=0
    _
  %s7 = ssub.s32 1, %s5
  %s8 = scalar_select 0, %s7, %s5
  loop: start=0, step=1, limit=4
  $region2: #{dense_gcn_forward.9} parent=0 // loop_pre_header
    _
  $region3: #{dense_gcn_forward.9} parent=0 // loop_header
    %s10 = sphi 0, %s14
    %p11 = scmp.ge.s32.totalorder %s10, 4
    %s17 = sphi 0, %s29
    %s18 = sphi 0, %s25
    %s19 = sphi 0, %s17
    %s20 = sphi 0, %s18
    %s21 = sphi 0, %s19
    %s22 = sphi 0, %s20
    %s34 = sphi 0, %s36
    %s37 = sphi 0, %s34
    %s38 = sphi 0, %s37
    %s54 = sphi 0, %s38
    %s58 = sphi 0, %s58
    %s60 = sphi 0, %s58
    %s61 = sphi 0, %s60
    %s75 = sphi 0, %s61
    %s79 = sphi 0, %s79
    %s81 = sphi 0, %s79
    %s82 = sphi 0, %s81
    %s96 = sphi 0, %s82
    %s102 = sphi 0, %s104
    %s105 = sphi 0, %s102
    %s106 = sphi 0, %s105
    %s122 = sphi 0, %s106
    %s128 = sphi 0, %s130
    %s131 = sphi 0, %s128
    %s132 = sphi 0, %s131
    %s148 = sphi 0, %s132
  $region4: #{dense_gcn_forward.9} parent=0 // loop_header_branch
    %13 = sbr.rel (%p11) target = $region8
  $region5: #{dense_gcn_forward.9} parent=0 // loop_body
    %s15 = ssub.s32 %s10, 1
    %s16 = ssub.s32 %s10, 2
    %s23 = sadd.s32 1, %s18
    %p24 = scmp.ge.s32.totalorder %s23, 1
    %s25 = scalar_select %p24, 0, %s23
    %s26 = sadd.s32 1, %s17
    %s27 = scalar_select %p24, %s26, %s17
    %p28 = scmp.ge.s32.totalorder %s27, 2
    %s29 = scalar_select %p28, 0, %s27
    %s30 = ssub.s32 %s17, %s29
    %s31 = ssub.s32 %s18, %s25
    %s32 = sor.u32 %s30, %s31
    %p33 = scmp.eq.s32.totalorder %s32, 0
    %s35 = sadd.s32 %s34, 1
    %s36 = scalar_select %p33, %s34, %s35
    %p39 = pneg %p33
    %p40 = scmp.eq.s32.totalorder %s10, 1
    %p41 = por %p39, %p40
    %p42 = scmp.ne.s32.totalorder %s34, %s37
    %p43 = scmp.eq.s32.totalorder %s10, 0
    %p44 = por %p42, %p43
    %p45 = scmp.ne.s32.totalorder %s34, %s37
    %p46 = scmp.eq.s32.totalorder %s15, 1
    %p47 = por %p45, %p46
    %p48 = scmp.ne.s32.totalorder %s37, %s38
    %p49 = scmp.eq.s32.totalorder %s15, 0
    %p50 = por %p48, %p49
    %p51 = scmp.ne.s32.totalorder %s37, %s38
    %p52 = scmp.eq.s32.totalorder %s16, 1
    %p53 = por %p51, %p52
    %p55 = scmp.ne.s32.totalorder %s38, %s54
    %p56 = scmp.eq.s32.totalorder %s16, 0
    %p57 = por %p55, %p56
    %s59 = sadd.s32 %s58, 1
    %p62 = scmp.eq.s32.totalorder %s10, 1
    %p63 = scmp.ne.s32.totalorder %s58, %s60
    %p64 = scmp.eq.s32.totalorder %s10, 0
    %p65 = por %p63, %p64
    %p66 = scmp.ne.s32.totalorder %s58, %s60
    %p67 = scmp.eq.s32.totalorder %s15, 1
    %p68 = por %p66, %p67
    %p69 = scmp.ne.s32.totalorder %s60, %s61
    %p70 = scmp.eq.s32.totalorder %s15, 0
    %p71 = por %p69, %p70
    %p72 = scmp.ne.s32.totalorder %s60, %s61
    %p73 = scmp.eq.s32.totalorder %s16, 1
    %p74 = por %p72, %p73
    %p76 = scmp.ne.s32.totalorder %s61, %s75
    %p77 = scmp.eq.s32.totalorder %s16, 0
    %p78 = por %p76, %p77
    %s80 = sadd.s32 %s79, 1
    %p83 = scmp.eq.s32.totalorder %s10, 1
    %p84 = scmp.ne.s32.totalorder %s79, %s81
    %p85 = scmp.eq.s32.totalorder %s10, 0
    %p86 = por %p84, %p85
    %p87 = scmp.ne.s32.totalorder %s79, %s81
    %p88 = scmp.eq.s32.totalorder %s15, 1
    %p89 = por %p87, %p88
    %p90 = scmp.ne.s32.totalorder %s81, %s82
    %p91 = scmp.eq.s32.totalorder %s15, 0
    %p92 = por %p90, %p91
    %p93 = scmp.ne.s32.totalorder %s81, %s82
    %p94 = scmp.eq.s32.totalorder %s16, 1
    %p95 = por %p93, %p94
    %p97 = scmp.ne.s32.totalorder %s82, %s96
    %p98 = scmp.eq.s32.totalorder %s16, 0
    %p99 = por %p97, %p98
    %s100 = ssub.s32 %s17, %s29
    %p101 = scmp.eq.s32.totalorder %s100, 0
    %s103 = sadd.s32 %s102, 1
    %s104 = scalar_select %p101, %s102, %s103
    %p107 = pneg %p101
    %p108 = scmp.eq.s32.totalorder %s10, 1
    %p109 = por %p107, %p108
    %p110 = scmp.ne.s32.totalorder %s102, %s105
    %p111 = scmp.eq.s32.totalorder %s10, 0
    %p112 = por %p110, %p111
    %p113 = scmp.ne.s32.totalorder %s102, %s105
    %p114 = scmp.eq.s32.totalorder %s15, 1
    %p115 = por %p113, %p114
    %p116 = scmp.ne.s32.totalorder %s105, %s106
    %p117 = scmp.eq.s32.totalorder %s15, 0
    %p118 = por %p116, %p117
    %p119 = scmp.ne.s32.totalorder %s105, %s106
    %p120 = scmp.eq.s32.totalorder %s16, 1
    %p121 = por %p119, %p120
    %p123 = scmp.ne.s32.totalorder %s106, %s122
    %p124 = scmp.eq.s32.totalorder %s16, 0
    %p125 = por %p123, %p124
    %s126 = ssub.s32 %s17, %s29
    %p127 = scmp.eq.s32.totalorder %s126, 0
    %s129 = sadd.s32 %s128, 1
    %s130 = scalar_select %p127, %s128, %s129
    %p133 = pneg %p127
    %p134 = scmp.eq.s32.totalorder %s10, 1
    %p135 = por %p133, %p134
    %p136 = scmp.ne.s32.totalorder %s128, %s131
    %p137 = scmp.eq.s32.totalorder %s10, 0
    %p138 = por %p136, %p137
    %p139 = scmp.ne.s32.totalorder %s128, %s131
    %p140 = scmp.eq.s32.totalorder %s15, 1
    %p141 = por %p139, %p140
    %p142 = scmp.ne.s32.totalorder %s131, %s132
    %p143 = scmp.eq.s32.totalorder %s15, 0
    %p144 = por %p142, %p143
    %p145 = scmp.ne.s32.totalorder %s131, %s132
    %p146 = scmp.eq.s32.totalorder %s16, 1
    %p147 = por %p145, %p146
    %p149 = scmp.ne.s32.totalorder %s132, %s148
    %p150 = scmp.eq.s32.totalorder %s16, 0
    %p151 = por %p149, %p150
    %p152 = scmp.le.s32.totalorder 1, %s10
    %p153 = scmp.lt.s32.totalorder %s10, 3
    %p154 = pnand %p152, %p153
    %p155 = pneg %p154
    // Predicated region
    $region9: #{dense_gcn_forward.9} parent=5 // pred_check
      _
    $region10: #{dense_gcn_forward.9} parent=5 // pred_check_branch
      %157 = sbr.rel (%p154) target = $region12
    $region11: #{dense_gcn_forward.9} parent=5 // pred_region
      %s158 = ssub.s32 %s10, 1
      // Predicated region
      $region13: #{dense_gcn_forward.9} parent=11 // pred_check
        %p159 = pneg %p71
      $region14: #{dense_gcn_forward.9} parent=11 // pred_check_branch
        %161 = sbr.rel (%p159) target = $region16
      $region15: #{dense_gcn_forward.9} parent=11 // pred_region
        _
      $region16: #{dense_gcn_forward.9} parent=11 // pred_fallthru
        _
      // Predicated region
      $region17: #{dense_gcn_forward.9} parent=11 // pred_check
        %p162 = pneg %p92
      $region18: #{dense_gcn_forward.9} parent=11 // pred_check_branch
        %164 = sbr.rel (%p162) target = $region20
      $region19: #{dense_gcn_forward.9} parent=11 // pred_region
        _
      $region20: #{dense_gcn_forward.9} parent=11 // pred_fallthru
        _
    $region12: #{dense_gcn_forward.9} parent=5 // pred_fallthru
      _
    %p165 = scmp.lt.s32.totalorder %s10, 2
    // Predicated region
    $region21: #{dense_gcn_forward.9} parent=5 // pred_check
      %p166 = pneg %p165
    $region22: #{dense_gcn_forward.9} parent=5 // pred_check_branch
      %168 = sbr.rel (%p166) target = $region24
    $region23: #{dense_gcn_forward.9} parent=5 // pred_region
      // Predicated region
      $region25: #{dense_gcn_forward.9} parent=23 // pred_check
        %p169 = pneg %p44
      $region26: #{dense_gcn_forward.9} parent=23 // pred_check_branch
        %171 = sbr.rel (%p169) target = $region28
      $region27: #{dense_gcn_forward.9} parent=23 // pred_region
        %s172 = smul.u32 4, %s17
        %s173 = smul.u32 2, %s18
        %p174 = scmp.lt.s32.totalorder %s172, 7
        %s175 = scalar_select %p174, %s172, 7
        %p176 = scmp.lt.s32.totalorder %s173, 1
        %s177 = scalar_select %p176, %s173, 1
        %s178 = smul.addr %s175, 2
        %s179 = sadd.s32 %s177, %s178
        %s180 = smul.addr %s179, 8
        %s181 = scalar_lea.vmem %s0, %s180
        %s182 = smul.u32 4, %s17
        %s183 = smul.u32 2, %s18
      $region28: #{dense_gcn_forward.9} parent=23 // pred_fallthru
        _
      // Predicated region
      $region29: #{dense_gcn_forward.9} parent=23 // pred_check
        %p184 = pneg %p112
      $region30: #{dense_gcn_forward.9} parent=23 // pred_check_branch
        %186 = sbr.rel (%p184) target = $region32
      $region31: #{dense_gcn_forward.9} parent=23 // pred_region
        %s187 = smul.u32 16, %s17
        %p188 = scmp.lt.s32.totalorder %s187, 31
        %s189 = scalar_select %p188, %s187, 31
        %s190 = smul.addr %s189, 8
        %s191 = scalar_lea.vmem %s3, %s190
        %s192 = smul.u32 16, %s17
      $region32: #{dense_gcn_forward.9} parent=23 // pred_fallthru
        _
    $region24: #{dense_gcn_forward.9} parent=5 // pred_fallthru
      _
    %p193 = scmp.le.s32.totalorder 1, %s10
    %p194 = scmp.lt.s32.totalorder %s10, 3
    %p195 = pnand %p193, %p194
    %p196 = pneg %p195
    // Predicated region
    $region33: #{dense_gcn_forward.9} parent=5 // pred_check
      _
    $region34: #{dense_gcn_forward.9} parent=5 // pred_check_branch
      %198 = sbr.rel (%p195) target = $region36
    $region35: #{dense_gcn_forward.9} parent=5 // pred_region
      %s199 = ssub.s32 %s10, 1
      %s200 = smul.u32 4, %s19
      %s201 = smul.u32 2, %s20
      %p202 = scmp.lt.s32.totalorder %s200, 7
      %s203 = scalar_select %p202, %s200, 7
      %p204 = scmp.lt.s32.totalorder %s201, 1
      %s205 = scalar_select %p204, %s201, 1
      %s206 = smul.addr %s203, 2
      %s207 = sadd.s32 %s205, %s206
      %s208 = smul.addr %s207, 8
      %s209 = scalar_lea.vmem %s0, %s208
      %p210 = pneg %p50
      %p211 = pneg %p47
      %p212 = pneg %p71
      %p213 = pneg %p68
      %p214 = pneg %p92
      %p215 = pneg %p89
      %s216 = smul.u32 16, %s19
      %p217 = scmp.lt.s32.totalorder %s216, 31
      %s218 = scalar_select %p217, %s216, 31
      %s219 = smul.addr %s218, 8
      %s220 = scalar_lea.vmem %s3, %s219
      %p221 = pneg %p118
      %p222 = pneg %p115
      %p223 = pneg %p144
      %p224 = pneg %p141
      %s225 = smul.u32 16, %s19
      %p226 = scmp.lt.s32.totalorder %s225, 31
      %s227 = scalar_select %p226, %s225, 31
      %s228 = smul.addr %s227, 4
      %s229 = scalar_lea.vmem %s4, %s228
      %s230 = smul.u32 4, %s19
      %s231 = smul.u32 2, %s20
      %p232 = scmp.lt.s32.totalorder %s230, 7
      %s233 = scalar_select %p232, %s230, 7
      %p234 = scmp.lt.s32.totalorder %s231, 1
      %s235 = scalar_select %p234, %s231, 1
      %s236 = smul.addr %s233, 2
      %s237 = sadd.s32 %s235, %s236
      %s238 = smul.addr %s237, 8
      %s239 = scalar_lea.vmem %s0, %s238
      %s240 = smul.u32 4, %s19
      %s241 = smul.u32 2, %s20
      %s242 = smul.u32 16, %s19
      %p243 = scmp.lt.s32.totalorder %s242, 31
      %s244 = scalar_select %p243, %s242, 31
      %s245 = smul.addr %s244, 8
      %s246 = scalar_lea.vmem %s3, %s245
      %s247 = smul.u32 16, %s19
      %s248 = smul.u32 16, %s19
      %p249 = scmp.lt.s32.totalorder %s248, 31
      %s250 = scalar_select %p249, %s248, 31
      %s251 = smul.addr %s250, 4
      %s252 = scalar_lea.vmem %s4, %s251
      %s253 = smul.u32 16, %s19
      %p255 = scmp.eq.s32.totalorder %s20, 0
      // Predicated region
      $region37: #{dense_gcn_forward.9} parent=35 // pred_check
        %p256 = pneg %p255
      $region38: #{dense_gcn_forward.9} parent=35 // pred_check_branch
        %258 = sbr.rel (%p256) target = $region40
      $region39: #{dense_gcn_forward.9} parent=35 // pred_region
        %259 = vst [vmem:[#allocation2] sm:$0xff] 0.0
        %260 = vst [vmem:[#allocation2 + $0x8] sm:$0xff] 0.0
        %261 = vst [vmem:[#allocation2 + $0x10] sm:$0xff] 0.0
        %262 = vst [vmem:[#allocation2 + $0x18] sm:$0xff] 0.0
        %263 = vst [vmem:[#allocation2 + $0x20] sm:$0xff] 0.0
        %264 = vst [vmem:[#allocation2 + $0x28] sm:$0xff] 0.0
        %265 = vst [vmem:[#allocation2 + $0x30] sm:$0xff] 0.0
        %266 = vst [vmem:[#allocation2 + $0x38] sm:$0xff] 0.0
        %267 = vst [vmem:[#allocation2 + $0x40] sm:$0xff] 0.0
        %268 = vst [vmem:[#allocation2 + $0x48] sm:$0xff] 0.0
        %269 = vst [vmem:[#allocation2 + $0x50] sm:$0xff] 0.0
        %270 = vst [vmem:[#allocation2 + $0x58] sm:$0xff] 0.0
        %271 = vst [vmem:[#allocation2 + $0x60] sm:$0xff] 0.0
        %272 = vst [vmem:[#allocation2 + $0x68] sm:$0xff] 0.0
        %273 = vst [vmem:[#allocation2 + $0x70] sm:$0xff] 0.0
        %274 = vst [vmem:[#allocation2 + $0x78] sm:$0xff] 0.0
      $region40: #{dense_gcn_forward.9} parent=35 // pred_fallthru
        _
      %s275 = smul.u32 %s20, 256
      %v276 = vld [vmem:[%s239] sm:$0xff]
      %v277 = vld [vmem:[%s239 + $0x8] sm:$0xff]
      %v278 = vld [vmem:[%s239 + $0x10] sm:$0xff]
      %v279 = vld [vmem:[%s239 + $0x18] sm:$0xff]
      %v280 = vld [vmem:[%s239 + $0x20] sm:$0xff]
      %v281 = vld [vmem:[%s239 + $0x28] sm:$0xff]
      %v282 = vld [vmem:[%s239 + $0x30] sm:$0xff]
      %v283 = vld [vmem:[%s239 + $0x38] sm:$0xff]
      %v284 = vunpack.c.l.s8.bf16 %v276
      %v285 = vunpack.c.l.s8.bf16 %v277
      %v286 = vunpack.c.h.s8.bf16 %v276
      %v287 = vunpack.c.h.s8.bf16 %v277
      %v288 = vunpack.c.l.s8.bf16 %v278
      %v289 = vunpack.c.l.s8.bf16 %v279
      %v290 = vunpack.c.h.s8.bf16 %v278
      %v291 = vunpack.c.h.s8.bf16 %v279
      %v292 = vunpack.c.l.s8.bf16 %v280
      %v293 = vunpack.c.l.s8.bf16 %v281
      %v294 = vunpack.c.h.s8.bf16 %v280
      %v295 = vunpack.c.h.s8.bf16 %v281
      %v296 = vunpack.c.l.s8.bf16 %v282
      %v297 = vunpack.c.l.s8.bf16 %v283
      %v298 = vunpack.c.h.s8.bf16 %v282
      %v299 = vunpack.c.h.s8.bf16 %v283
      %v300 = vld [vmem:[#allocation2] sm:$0xff]
      %v301 = vld [vmem:[#allocation2 + $0x8] sm:$0xff]
      %v302 = vld [vmem:[#allocation2 + $0x10] sm:$0xff]
      %v303 = vld [vmem:[#allocation2 + $0x18] sm:$0xff]
      %v304 = vld [vmem:[#allocation2 + $0x20] sm:$0xff]
      %v305 = vld [vmem:[#allocation2 + $0x28] sm:$0xff]
      %v306 = vld [vmem:[#allocation2 + $0x30] sm:$0xff]
      %v307 = vld [vmem:[#allocation2 + $0x38] sm:$0xff]
      %v308 = vld [vmem:[#allocation2 + $0x40] sm:$0xff]
      %v309 = vld [vmem:[#allocation2 + $0x48] sm:$0xff]
      %v310 = vld [vmem:[#allocation2 + $0x50] sm:$0xff]
      %v311 = vld [vmem:[#allocation2 + $0x58] sm:$0xff]
      %v312 = vld [vmem:[#allocation2 + $0x60] sm:$0xff]
      %v313 = vld [vmem:[#allocation2 + $0x68] sm:$0xff]
      %v314 = vld [vmem:[#allocation2 + $0x70] sm:$0xff]
      %v315 = vld [vmem:[#allocation2 + $0x78] sm:$0xff]
      %s316 = sshra.s32 %s275, 3
      %s317 = sand.u32 %s275, 7
      %s318 = smul.addr %s316, 4
      %s319 = scalar_lea.vmem %s1, %s318
      %v320 = vld [vmem:[%s319] sm:$0xf]
      %v321 = vld [vmem:[%s319 + $0x4] sm:$0xf]
      %v322 = vld [vmem:[%s319 + $0x8] sm:$0xf]
      %v323 = vld [vmem:[%s319 + $0xc] sm:$0xf]
      %v324 = vld [vmem:[%s319 + $0x10] sm:$0xf]
      %v325 = vld [vmem:[%s319 + $0x14] sm:$0xf]
      %v326 = vld [vmem:[%s319 + $0x18] sm:$0xf]
      %v327 = vld [vmem:[%s319 + $0x1c] sm:$0xf]
      %v328 = vld [vmem:[%s319 + $0x20] sm:$0xf]
      %v329 = vld [vmem:[%s319 + $0x24] sm:$0xf]
      %v330 = vld [vmem:[%s319 + $0x28] sm:$0xf]
      %v331 = vld [vmem:[%s319 + $0x2c] sm:$0xf]
      %v332 = vld [vmem:[%s319 + $0x30] sm:$0xf]
      %v333 = vld [vmem:[%s319 + $0x34] sm:$0xf]
      %v334 = vld [vmem:[%s319 + $0x38] sm:$0xf]
      %v335 = vld [vmem:[%s319 + $0x3c] sm:$0xf]
      %v336 = vld [vmem:[%s319 + $0x40] sm:$0xf]
      %v337 = vld [vmem:[%s319 + $0x44] sm:$0xf]
      %v338 = vld [vmem:[%s319 + $0x48] sm:$0xf]
      %v339 = vld [vmem:[%s319 + $0x4c] sm:$0xf]
      %v340 = vld [vmem:[%s319 + $0x50] sm:$0xf]
      %v341 = vld [vmem:[%s319 + $0x54] sm:$0xf]
      %v342 = vld [vmem:[%s319 + $0x58] sm:$0xf]
      %v343 = vld [vmem:[%s319 + $0x5c] sm:$0xf]
      %v344 = vld [vmem:[%s319 + $0x60] sm:$0xf]
      %v345 = vld [vmem:[%s319 + $0x64] sm:$0xf]
      %v346 = vld [vmem:[%s319 + $0x68] sm:$0xf]
      %v347 = vld [vmem:[%s319 + $0x6c] sm:$0xf]
      %v348 = vld [vmem:[%s319 + $0x70] sm:$0xf]
      %v349 = vld [vmem:[%s319 + $0x74] sm:$0xf]
      %v350 = vld [vmem:[%s319 + $0x78] sm:$0xf]
      %v351 = vld [vmem:[%s319 + $0x7c] sm:$0xf]
      %v384 = vunpack.c.l.b16 %v320
      %v385 = vunpack.c.l.b16 %v321
      %v386 = vunpack.c.l.b16 %v322
      %v387 = vunpack.c.l.b16 %v323
      %v388 = vunpack.c.l.b16 %v324
      %v389 = vunpack.c.l.b16 %v325
      %v390 = vunpack.c.l.b16 %v326
      %v391 = vunpack.c.l.b16 %v327
      %v392 = vunpack.c.l.b16 %v328
      %v393 = vunpack.c.l.b16 %v329
      %v394 = vunpack.c.l.b16 %v330
      %v395 = vunpack.c.l.b16 %v331
      %v396 = vunpack.c.l.b16 %v332
      %v397 = vunpack.c.l.b16 %v333
      %v398 = vunpack.c.l.b16 %v334
      %v399 = vunpack.c.l.b16 %v335
      %v400 = vunpack.c.l.b16 %v336
      %v401 = vunpack.c.l.b16 %v337
      %v402 = vunpack.c.l.b16 %v338
      %v403 = vunpack.c.l.b16 %v339
      %v404 = vunpack.c.l.b16 %v340
      %v405 = vunpack.c.l.b16 %v341
      %v406 = vunpack.c.l.b16 %v342
      %v407 = vunpack.c.l.b16 %v343
      %v408 = vunpack.c.l.b16 %v344
      %v409 = vunpack.c.l.b16 %v345
      %v410 = vunpack.c.l.b16 %v346
      %v411 = vunpack.c.l.b16 %v347
      %v412 = vunpack.c.l.b16 %v348
      %v413 = vunpack.c.l.b16 %v349
      %v414 = vunpack.c.l.b16 %v350
      %v415 = vunpack.c.l.b16 %v351
      %v416 = vpack.c.b16 %v385, %v384
      %v417 = vpack.c.b16 %v387, %v386
      %v418 = vpack.c.b16 %v389, %v388
      %v419 = vpack.c.b16 %v391, %v390
      %v420 = vpack.c.b16 %v393, %v392
      %v421 = vpack.c.b16 %v395, %v394
      %v422 = vpack.c.b16 %v397, %v396
      %v423 = vpack.c.b16 %v399, %v398
      %v424 = vpack.c.b16 %v401, %v400
      %v425 = vpack.c.b16 %v403, %v402
      %v426 = vpack.c.b16 %v405, %v404
      %v427 = vpack.c.b16 %v407, %v406
      %v428 = vpack.c.b16 %v409, %v408
      %v429 = vpack.c.b16 %v411, %v410
      %v430 = vpack.c.b16 %v413, %v412
      %v431 = vpack.c.b16 %v415, %v414
      %448 = vmatprep.subr.bf16.mxu0 0
      %449 = vmatpush1.bf16.msra.mxu0 %v416
      %450 = vmatprep.subr.bf16.mxu0 0
      %451 = vmatpush1.bf16.msra.mxu0 %v417
      %452 = vmatprep.subr.bf16.mxu0 0
      %453 = vmatpush1.bf16.msra.mxu0 %v418
      %454 = vmatprep.subr.bf16.mxu0 0
      %455 = vmatpush1.bf16.msra.mxu0 %v419
      %456 = vmatprep.subr.bf16.mxu0 0
      %457 = vmatpush1.bf16.msra.mxu0 %v420
      %458 = vmatprep.subr.bf16.mxu0 0
      %459 = vmatpush1.bf16.msra.mxu0 %v421
      %460 = vmatprep.subr.bf16.mxu0 0
      %461 = vmatpush1.bf16.msra.mxu0 %v422
      %462 = vmatprep.subr.bf16.mxu0 0
      %463 = vmatpush1.bf16.msra.mxu0 %v423
      %464 = vmatprep.subr.bf16.mxu0 0
      %465 = vmatpush1.bf16.msra.mxu0 %v424
      %466 = vmatprep.subr.bf16.mxu0 0
      %467 = vmatpush1.bf16.msra.mxu0 %v425
      %468 = vmatprep.subr.bf16.mxu0 0
      %469 = vmatpush1.bf16.msra.mxu0 %v426
      %470 = vmatprep.subr.bf16.mxu0 0
      %471 = vmatpush1.bf16.msra.mxu0 %v427
      %472 = vmatprep.subr.bf16.mxu0 0
      %473 = vmatpush1.bf16.msra.mxu0 %v428
      %474 = vmatprep.subr.bf16.mxu0 0
      %475 = vmatpush1.bf16.msra.mxu0 %v429
      %476 = vmatprep.subr.bf16.mxu0 0
      %477 = vmatpush1.bf16.msra.mxu0 %v430
      %478 = vmatprep.subr.bf16.mxu0 0
      %479 = vmatpush1.bf16.msra.mxu0 %v431
      %480 = vmatprep.mubr.bf16.mxu0 %v285
      %481 = vmatmul.mubr.bf16.gmra.mrb[0].mxu0 %v284
      %v482 = vpop.f32.mrb[0].mxu0
      %v483 = vadd.f32 0.0, %v482
      %v484 = vpop.f32.mrb[0].mxu0
      %v485 = vpop.f32.mrb[0].mxu0
      %v486 = vadd.f32 0.0, %v485
      %v487 = vpop.f32.mrb[0].mxu0
      %488 = vmatprep.mubr.bf16.mxu0 %v287
      %489 = vmatmul.mubr.bf16.gmra.mrb[0].mxu0 %v286
      %v490 = vpop.f32.mrb[0].mxu0
      %v491 = vadd.f32 0.0, %v490
      %v492 = vpop.f32.mrb[0].mxu0
      %v493 = vpop.f32.mrb[0].mxu0
      %v494 = vadd.f32 0.0, %v493
      %v495 = vpop.f32.mrb[0].mxu0
      %496 = vmatprep.mubr.bf16.mxu0 %v289
      %497 = vmatmul.mubr.bf16.gmra.mrb[0].mxu0 %v288
      %v498 = vpop.f32.mrb[0].mxu0
      %v499 = vadd.f32 0.0, %v498
      %v500 = vpop.f32.mrb[0].mxu0
      %v501 = vpop.f32.mrb[0].mxu0
      %v502 = vadd.f32 0.0, %v501
      %v503 = vpop.f32.mrb[0].mxu0
      %504 = vmatprep.mubr.bf16.mxu0 %v291
      %505 = vmatmul.mubr.bf16.gmra.mrb[0].mxu0 %v290
      %v506 = vpop.f32.mrb[0].mxu0
      %v507 = vadd.f32 0.0, %v506
      %v508 = vpop.f32.mrb[0].mxu0
      %v509 = vpop.f32.mrb[0].mxu0
      %v510 = vadd.f32 0.0, %v509
      %v511 = vpop.f32.mrb[0].mxu0
      %512 = vmatprep.mubr.bf16.mxu0 %v293
      %513 = vmatmul.mubr.bf16.gmra.mrb[0].mxu0 %v292
      %v514 = vpop.f32.mrb[0].mxu0
      %v515 = vadd.f32 0.0, %v514
      %v516 = vpop.f32.mrb[0].mxu0
      %v517 = vpop.f32.mrb[0].mxu0
      %v518 = vadd.f32 0.0, %v517
      %v519 = vpop.f32.mrb[0].mxu0
      %520 = vmatprep.mubr.bf16.mxu0 %v295
      %521 = vmatmul.mubr.bf16.gmra.mrb[0].mxu0 %v294
      %v522 = vpop.f32.mrb[0].mxu0
      %v523 = vadd.f32 0.0, %v522
      %v524 = vpop.f32.mrb[0].mxu0
      %v525 = vpop.f32.mrb[0].mxu0
      %v526 = vadd.f32 0.0, %v525
      %v527 = vpop.f32.mrb[0].mxu0
      %528 = vmatprep.mubr.bf16.mxu0 %v297
      %529 = vmatmul.mubr.bf16.gmra.mrb[0].mxu0 %v296
      %v530 = vpop.f32.mrb[0].mxu0
      %v531 = vadd.f32 0.0, %v530
      %v532 = vpop.f32.mrb[0].mxu0
      %v533 = vpop.f32.mrb[0].mxu0
      %v534 = vadd.f32 0.0, %v533
      %v535 = vpop.f32.mrb[0].mxu0
      %536 = vmatprep.mubr.bf16.mxu0 %v299
      %537 = vmatmul.mubr.bf16.gmra.mrb[0].mxu0 %v298
      %v538 = vpop.f32.mrb[0].mxu0
      %v539 = vadd.f32 0.0, %v538
      %v540 = vpop.f32.mrb[0].mxu0
      %v541 = vpop.f32.mrb[0].mxu0
      %v542 = vadd.f32 0.0, %v541
      %v543 = vpop.f32.mrb[0].mxu0
      %544 = vdwg.mxu0
      %v545 = vadd.f32 %v300, %v483
      %v546 = vadd.f32 %v301, %v486
      %v547 = vadd.f32 %v302, %v491
      %v548 = vadd.f32 %v303, %v494
      %v549 = vadd.f32 %v304, %v499
      %v550 = vadd.f32 %v305, %v502
      %v551 = vadd.f32 %v306, %v507
      %v552 = vadd.f32 %v307, %v510
      %v553 = vadd.f32 %v308, %v515
      %v554 = vadd.f32 %v309, %v518
      %v555 = vadd.f32 %v310, %v523
      %v556 = vadd.f32 %v311, %v526
      %v557 = vadd.f32 %v312, %v531
      %v558 = vadd.f32 %v313, %v534
      %v559 = vadd.f32 %v314, %v539
      %v560 = vadd.f32 %v315, %v542
      %561 = vst [vmem:[#allocation2] sm:$0xff] %v545
      %562 = vst [vmem:[#allocation2 + $0x8] sm:$0xff] %v546
      %563 = vst [vmem:[#allocation2 + $0x10] sm:$0xff] %v547
      %564 = vst [vmem:[#allocation2 + $0x18] sm:$0xff] %v548
      %565 = vst [vmem:[#allocation2 + $0x20] sm:$0xff] %v549
      %566 = vst [vmem:[#allocation2 + $0x28] sm:$0xff] %v550
      %567 = vst [vmem:[#allocation2 + $0x30] sm:$0xff] %v551
      %568 = vst [vmem:[#allocation2 + $0x38] sm:$0xff] %v552
      %569 = vst [vmem:[#allocation2 + $0x40] sm:$0xff] %v553
      %570 = vst [vmem:[#allocation2 + $0x48] sm:$0xff] %v554
      %571 = vst [vmem:[#allocation2 + $0x50] sm:$0xff] %v555
      %572 = vst [vmem:[#allocation2 + $0x58] sm:$0xff] %v556
      %573 = vst [vmem:[#allocation2 + $0x60] sm:$0xff] %v557
      %574 = vst [vmem:[#allocation2 + $0x68] sm:$0xff] %v558
      %575 = vst [vmem:[#allocation2 + $0x70] sm:$0xff] %v559
      %576 = vst [vmem:[#allocation2 + $0x78] sm:$0xff] %v560
      // Predicated region
      $region41: #{dense_gcn_forward.9} parent=35 // pred_check
        %p577 = pneg %p255
      $region42: #{dense_gcn_forward.9} parent=35 // pred_check_branch
        %579 = sbr.rel (%p577) target = $region44
      $region43: #{dense_gcn_forward.9} parent=35 // pred_region
        %v580 = vld [vmem:[#allocation2] sm:$0xff]
        %v581 = vld [vmem:[#allocation2 + $0x8] sm:$0xff]
        %v582 = vld [vmem:[#allocation2 + $0x10] sm:$0xff]
        %v583 = vld [vmem:[#allocation2 + $0x18] sm:$0xff]
        %v584 = vld [vmem:[#allocation2 + $0x20] sm:$0xff]
        %v585 = vld [vmem:[#allocation2 + $0x28] sm:$0xff]
        %v586 = vld [vmem:[#allocation2 + $0x30] sm:$0xff]
        %v587 = vld [vmem:[#allocation2 + $0x38] sm:$0xff]
        %v588 = vld [vmem:[#allocation2 + $0x40] sm:$0xff]
        %v589 = vld [vmem:[#allocation2 + $0x48] sm:$0xff]
        %v590 = vld [vmem:[#allocation2 + $0x50] sm:$0xff]
        %v591 = vld [vmem:[#allocation2 + $0x58] sm:$0xff]
        %v592 = vld [vmem:[#allocation2 + $0x60] sm:$0xff]
        %v593 = vld [vmem:[#allocation2 + $0x68] sm:$0xff]
        %v594 = vld [vmem:[#allocation2 + $0x70] sm:$0xff]
        %v595 = vld [vmem:[#allocation2 + $0x78] sm:$0xff]
        %v596 = vld [vmem:[%s246] sm:$0xff]
        %v597 = vld [vmem:[%s246 + $0x8] sm:$0xff]
        %v598 = vld [vmem:[%s246 + $0x10] sm:$0xff]
        %v599 = vld [vmem:[%s246 + $0x18] sm:$0xff]
        %v600 = vld [vmem:[%s246 + $0x20] sm:$0xff]
        %v601 = vld [vmem:[%s246 + $0x28] sm:$0xff]
        %v602 = vld [vmem:[%s246 + $0x30] sm:$0xff]
        %v603 = vld [vmem:[%s246 + $0x38] sm:$0xff]
        %v604 = vld [vmem:[%s246 + $0x40] sm:$0xff]
        %v605 = vld [vmem:[%s246 + $0x48] sm:$0xff]
        %v606 = vld [vmem:[%s246 + $0x50] sm:$0xff]
        %v607 = vld [vmem:[%s246 + $0x58] sm:$0xff]
        %v608 = vld [vmem:[%s246 + $0x60] sm:$0xff]
        %v609 = vld [vmem:[%s246 + $0x68] sm:$0xff]
        %v610 = vld [vmem:[%s246 + $0x70] sm:$0xff]
        %v611 = vld [vmem:[%s246 + $0x78] sm:$0xff]
        %613 = vset.pattern.permute.xlu0 0
        %614 = vperm.xlu0 %613, %v596
        %v615 = vpop.permute.xlu0 %614
        %618 = vset.pattern.permute.xlu0 0
        %619 = vperm.xlu0 %618, %v597
        %v620 = vpop.permute.xlu0 %619
        %623 = vset.pattern.permute.xlu0 0
        %624 = vperm.xlu0 %623, %v598
        %v625 = vpop.permute.xlu0 %624
        %628 = vset.pattern.permute.xlu0 0
        %629 = vperm.xlu0 %628, %v599
        %v630 = vpop.permute.xlu0 %629
        %633 = vset.pattern.permute.xlu0 0
        %634 = vperm.xlu0 %633, %v600
        %v635 = vpop.permute.xlu0 %634
        %638 = vset.pattern.permute.xlu0 0
        %639 = vperm.xlu0 %638, %v601
        %v640 = vpop.permute.xlu0 %639
        %643 = vset.pattern.permute.xlu0 0
        %644 = vperm.xlu0 %643, %v602
        %v645 = vpop.permute.xlu0 %644
        %648 = vset.pattern.permute.xlu0 0
        %649 = vperm.xlu0 %648, %v603
        %v650 = vpop.permute.xlu0 %649
        %653 = vset.pattern.permute.xlu0 0
        %654 = vperm.xlu0 %653, %v604
        %v655 = vpop.permute.xlu0 %654
        %658 = vset.pattern.permute.xlu0 0
        %659 = vperm.xlu0 %658, %v605
        %v660 = vpop.permute.xlu0 %659
        %663 = vset.pattern.permute.xlu0 0
        %664 = vperm.xlu0 %663, %v606
        %v665 = vpop.permute.xlu0 %664
        %668 = vset.pattern.permute.xlu0 0
        %669 = vperm.xlu0 %668, %v607
        %v670 = vpop.permute.xlu0 %669
        %673 = vset.pattern.permute.xlu0 0
        %674 = vperm.xlu0 %673, %v608
        %v675 = vpop.permute.xlu0 %674
        %678 = vset.pattern.permute.xlu0 0
        %679 = vperm.xlu0 %678, %v609
        %v680 = vpop.permute.xlu0 %679
        %683 = vset.pattern.permute.xlu0 0
        %684 = vperm.xlu0 %683, %v610
        %v685 = vpop.permute.xlu0 %684
        %688 = vset.pattern.permute.xlu0 0
        %689 = vperm.xlu0 %688, %v611
        %v690 = vpop.permute.xlu0 %689
        %v692 = vmul.f32 %v580, %v615
        %v693 = vmul.f32 %v581, %v620
        %v694 = vmul.f32 %v582, %v625
        %v695 = vmul.f32 %v583, %v630
        %v696 = vmul.f32 %v584, %v635
        %v697 = vmul.f32 %v585, %v640
        %v698 = vmul.f32 %v586, %v645
        %v699 = vmul.f32 %v587, %v650
        %v700 = vmul.f32 %v588, %v655
        %v701 = vmul.f32 %v589, %v660
        %v702 = vmul.f32 %v590, %v665
        %v703 = vmul.f32 %v591, %v670
        %v704 = vmul.f32 %v592, %v675
        %v705 = vmul.f32 %v593, %v680
        %v706 = vmul.f32 %v594, %v685
        %v707 = vmul.f32 %v595, %v690
        %v708 = vld [vmem:[%s2] sm:$0x1]
        %v710 = vlaneseq
        %v711 = vshrl.u32 %v710, 7
        %v712 = vsub.s32 0, %v711
        %v713 = vrot.slane %v708, %v712
        %v715 = vadd.f32 %v692, %v713
        %v716 = vadd.f32 %v693, %v713
        %v717 = vadd.f32 %v694, %v713
        %v718 = vadd.f32 %v695, %v713
        %v719 = vadd.f32 %v696, %v713
        %v720 = vadd.f32 %v697, %v713
        %v721 = vadd.f32 %v698, %v713
        %v722 = vadd.f32 %v699, %v713
        %v723 = vadd.f32 %v700, %v713
        %v724 = vadd.f32 %v701, %v713
        %v725 = vadd.f32 %v702, %v713
        %v726 = vadd.f32 %v703, %v713
        %v727 = vadd.f32 %v704, %v713
        %v728 = vadd.f32 %v705, %v713
        %v729 = vadd.f32 %v706, %v713
        %v730 = vadd.f32 %v707, %v713
        %v731 = vmax.f32 %v715, 0.0
        %v732 = vmax.f32 %v716, 0.0
        %v733 = vmax.f32 %v717, 0.0
        %v734 = vmax.f32 %v718, 0.0
        %v735 = vmax.f32 %v719, 0.0
        %v736 = vmax.f32 %v720, 0.0
        %v737 = vmax.f32 %v721, 0.0
        %v738 = vmax.f32 %v722, 0.0
        %v739 = vmax.f32 %v723, 0.0
        %v740 = vmax.f32 %v724, 0.0
        %v741 = vmax.f32 %v725, 0.0
        %v742 = vmax.f32 %v726, 0.0
        %v743 = vmax.f32 %v727, 0.0
        %v744 = vmax.f32 %v728, 0.0
        %v745 = vmax.f32 %v729, 0.0
        %v746 = vmax.f32 %v730, 0.0
        %v747 = vpack.c.bf16 %v732, %v731
        %v748 = vpack.c.bf16 %v734, %v733
        %v749 = vpack.c.bf16 %v736, %v735
        %v750 = vpack.c.bf16 %v738, %v737
        %v751 = vpack.c.bf16 %v740, %v739
        %v752 = vpack.c.bf16 %v742, %v741
        %v753 = vpack.c.bf16 %v744, %v743
        %v754 = vpack.c.bf16 %v746, %v745
        %v763 = vunpack.c.l.b16 %v747
        %v764 = vunpack.c.h.b16 %v747
        %v765 = vunpack.c.l.b16 %v748
        %v766 = vunpack.c.h.b16 %v748
        %v767 = vunpack.c.l.b16 %v749
        %v768 = vunpack.c.h.b16 %v749
        %v769 = vunpack.c.l.b16 %v750
        %v770 = vunpack.c.h.b16 %v750
        %v771 = vunpack.c.l.b16 %v751
        %v772 = vunpack.c.h.b16 %v751
        %v773 = vunpack.c.l.b16 %v752
        %v774 = vunpack.c.h.b16 %v752
        %v775 = vunpack.c.l.b16 %v753
        %v776 = vunpack.c.h.b16 %v753
        %v777 = vunpack.c.l.b16 %v754
        %v778 = vunpack.c.h.b16 %v754
        %v779 = vpack.c.b16 %v763, %v763
        %v780 = vpack.c.b16 %v764, %v764
        %v781 = vpack.c.b16 %v765, %v765
        %v782 = vpack.c.b16 %v766, %v766
        %v783 = vpack.c.b16 %v767, %v767
        %v784 = vpack.c.b16 %v768, %v768
        %v785 = vpack.c.b16 %v769, %v769
        %v786 = vpack.c.b16 %v770, %v770
        %v787 = vpack.c.b16 %v771, %v771
        %v788 = vpack.c.b16 %v772, %v772
        %v789 = vpack.c.b16 %v773, %v773
        %v790 = vpack.c.b16 %v774, %v774
        %v791 = vpack.c.b16 %v775, %v775
        %v792 = vpack.c.b16 %v776, %v776
        %v793 = vpack.c.b16 %v777, %v777
        %v794 = vpack.c.b16 %v778, %v778
        %811 = vst [vmem:[%s252] sm:$0xf] %v779
        %812 = vst [vmem:[%s252 + $0x4] sm:$0xf] %v780
        %813 = vst [vmem:[%s252 + $0x8] sm:$0xf] %v781
        %814 = vst [vmem:[%s252 + $0xc] sm:$0xf] %v782
        %815 = vst [vmem:[%s252 + $0x10] sm:$0xf] %v783
        %816 = vst [vmem:[%s252 + $0x14] sm:$0xf] %v784
        %817 = vst [vmem:[%s252 + $0x18] sm:$0xf] %v785
        %818 = vst [vmem:[%s252 + $0x1c] sm:$0xf] %v786
        %819 = vst [vmem:[%s252 + $0x20] sm:$0xf] %v787
        %820 = vst [vmem:[%s252 + $0x24] sm:$0xf] %v788
        %821 = vst [vmem:[%s252 + $0x28] sm:$0xf] %v789
        %822 = vst [vmem:[%s252 + $0x2c] sm:$0xf] %v790
        %823 = vst [vmem:[%s252 + $0x30] sm:$0xf] %v791
        %824 = vst [vmem:[%s252 + $0x34] sm:$0xf] %v792
        %825 = vst [vmem:[%s252 + $0x38] sm:$0xf] %v793
        %826 = vst [vmem:[%s252 + $0x3c] sm:$0xf] %v794
      $region44: #{dense_gcn_forward.9} parent=35 // pred_fallthru
        _
      %s827 = smul.u32 16, %s19
      %p828 = scmp.lt.s32.totalorder %s827, 31
      %s829 = scalar_select %p828, %s827, 31
      %s830 = smul.addr %s829, 4
      %s831 = scalar_lea.vmem %s4, %s830
      // Predicated region
      $region45: #{dense_gcn_forward.9} parent=35 // pred_check
        %p832 = pneg %p141
      $region46: #{dense_gcn_forward.9} parent=35 // pred_check_branch
        %834 = sbr.rel (%p832) target = $region48
      $region47: #{dense_gcn_forward.9} parent=35 // pred_region
        %s835 = smul.u32 16, %s19
      $region48: #{dense_gcn_forward.9} parent=35 // pred_fallthru
        _
    $region36: #{dense_gcn_forward.9} parent=5 // pred_fallthru
      _
    %p836 = scmp.le.s32.totalorder 2, %s10
    // Predicated region
    $region49: #{dense_gcn_forward.9} parent=5 // pred_check
      %p837 = pneg %p836
    $region50: #{dense_gcn_forward.9} parent=5 // pred_check_branch
      %839 = sbr.rel (%p837) target = $region52
    $region51: #{dense_gcn_forward.9} parent=5 // pred_region
      %s840 = ssub.s32 %s10, 2
      // Predicated region
      $region53: #{dense_gcn_forward.9} parent=51 // pred_check
        %p841 = pneg %p147
      $region54: #{dense_gcn_forward.9} parent=51 // pred_check_branch
        %843 = sbr.rel (%p841) target = $region56
      $region55: #{dense_gcn_forward.9} parent=51 // pred_region
        %s844 = smul.u32 16, %s21
        %p845 = scmp.lt.s32.totalorder %s844, 31
        %s846 = scalar_select %p845, %s844, 31
        %s847 = smul.addr %s846, 4
        %s848 = scalar_lea.vmem %s4, %s847
      $region56: #{dense_gcn_forward.9} parent=51 // pred_fallthru
        _
    $region52: #{dense_gcn_forward.9} parent=5 // pred_fallthru
      _
  $region6: #{dense_gcn_forward.9} parent=0 // loop_footer
    %s14 = sadd.s32 1, %s10
  $region7: #{dense_gcn_forward.9} parent=0 // loop_footer_branch
    %9 = sbr.rel target = $region3
  $region8: #{dense_gcn_forward.9} parent=0 // loop_exit
    _

// kernel: dense_gcn_forward.10
$region0: #{dense_gcn_forward.10}
  #allocation0 [shape = 'u32[]', space=smem, size = 0x4, offset = 0x4, fixed_abs, tag = 'smem constant byte address 0x4 - core index']
  #allocation1 [shape = 'u32[144,128]{1,0:T(1,128)}', space=vmem, size = 0x12000, scoped, tag = 'internal scratch']
  %s0 = inlined_call_operand.vmem [shape: bf16[256,128], index: 0, kind: input, shape index: {}]
  %s1 = inlined_call_operand.vmem [shape: f32[256,1], index: 1, kind: input, shape index: {}]
  %s2 = inlined_call_operand.vmem [shape: bf16[128,128], index: 2, kind: input, shape index: {}]
  %s3 = inlined_call_operand.vmem [shape: bf16[256,128], index: 3, kind: output, shape index: {}]
  %s4 = sld [smem:[#allocation0]]
  $region22: #{dense_gcn_forward.10} parent=0
    _
  %s6 = ssub.s32 1, %s4
  %s7 = scalar_select 0, %s6, %s4
  // Predicated region
  $region2: #{dense_gcn_forward.10} parent=0 // pred_check
    _
  $region3: #{dense_gcn_forward.10} parent=0 // pred_check_branch
    %9 = sbr.rel (0) target = $region5
  $region4: #{dense_gcn_forward.10} parent=0 // pred_region
    _
  $region5: #{dense_gcn_forward.10} parent=0 // pred_fallthru
    _
  // Predicated region
  $region6: #{dense_gcn_forward.10} parent=0 // pred_check
    _
  $region7: #{dense_gcn_forward.10} parent=0 // pred_check_branch
    %11 = sbr.rel (0) target = $region9
  $region8: #{dense_gcn_forward.10} parent=0 // pred_region
    _
  $region9: #{dense_gcn_forward.10} parent=0 // pred_fallthru
    _
  // Predicated region
  $region10: #{dense_gcn_forward.10} parent=0 // pred_check
    _
  $region11: #{dense_gcn_forward.10} parent=0 // pred_check_branch
    %13 = sbr.rel (0) target = $region13
  $region12: #{dense_gcn_forward.10} parent=0 // pred_region
    _
  $region13: #{dense_gcn_forward.10} parent=0 // pred_fallthru
    _
  %v15 = vld [vmem:[%s0] sm:$0xf]
  %v16 = vld [vmem:[%s0 + $0x4] sm:$0xf]
  %v17 = vld [vmem:[%s0 + $0x8] sm:$0xf]
  %v18 = vld [vmem:[%s0 + $0xc] sm:$0xf]
  %v19 = vld [vmem:[%s0 + $0x10] sm:$0xf]
  %v20 = vld [vmem:[%s0 + $0x14] sm:$0xf]
  %v21 = vld [vmem:[%s0 + $0x18] sm:$0xf]
  %v22 = vld [vmem:[%s0 + $0x1c] sm:$0xf]
  %v23 = vld [vmem:[%s0 + $0x20] sm:$0xf]
  %v24 = vld [vmem:[%s0 + $0x24] sm:$0xf]
  %v25 = vld [vmem:[%s0 + $0x28] sm:$0xf]
  %v26 = vld [vmem:[%s0 + $0x2c] sm:$0xf]
  %v27 = vld [vmem:[%s0 + $0x30] sm:$0xf]
  %v28 = vld [vmem:[%s0 + $0x34] sm:$0xf]
  %v29 = vld [vmem:[%s0 + $0x38] sm:$0xf]
  %v30 = vld [vmem:[%s0 + $0x3c] sm:$0xf]
  %v31 = vld [vmem:[%s0 + $0x40] sm:$0xf]
  %v32 = vld [vmem:[%s0 + $0x44] sm:$0xf]
  %v33 = vld [vmem:[%s0 + $0x48] sm:$0xf]
  %v34 = vld [vmem:[%s0 + $0x4c] sm:$0xf]
  %v35 = vld [vmem:[%s0 + $0x50] sm:$0xf]
  %v36 = vld [vmem:[%s0 + $0x54] sm:$0xf]
  %v37 = vld [vmem:[%s0 + $0x58] sm:$0xf]
  %v38 = vld [vmem:[%s0 + $0x5c] sm:$0xf]
  %v39 = vld [vmem:[%s0 + $0x60] sm:$0xf]
  %v40 = vld [vmem:[%s0 + $0x64] sm:$0xf]
  %v41 = vld [vmem:[%s0 + $0x68] sm:$0xf]
  %v42 = vld [vmem:[%s0 + $0x6c] sm:$0xf]
  %v43 = vld [vmem:[%s0 + $0x70] sm:$0xf]
  %v44 = vld [vmem:[%s0 + $0x74] sm:$0xf]
  %v45 = vld [vmem:[%s0 + $0x78] sm:$0xf]
  %v46 = vld [vmem:[%s0 + $0x7c] sm:$0xf]
  %v47 = vunpack.c.l.bf16 %v15
  %v48 = vunpack.c.l.bf16 %v16
  %v49 = vunpack.c.l.bf16 %v17
  %v50 = vunpack.c.l.bf16 %v18
  %v51 = vunpack.c.l.bf16 %v19
  %v52 = vunpack.c.l.bf16 %v20
  %v53 = vunpack.c.l.bf16 %v21
  %v54 = vunpack.c.l.bf16 %v22
  %v55 = vunpack.c.l.bf16 %v23
  %v56 = vunpack.c.l.bf16 %v24
  %v57 = vunpack.c.l.bf16 %v25
  %v58 = vunpack.c.l.bf16 %v26
  %v59 = vunpack.c.l.bf16 %v27
  %v60 = vunpack.c.l.bf16 %v28
  %v61 = vunpack.c.l.bf16 %v29
  %v62 = vunpack.c.l.bf16 %v30
  %v63 = vunpack.c.l.bf16 %v31
  %v64 = vunpack.c.l.bf16 %v32
  %v65 = vunpack.c.l.bf16 %v33
  %v66 = vunpack.c.l.bf16 %v34
  %v67 = vunpack.c.l.bf16 %v35
  %v68 = vunpack.c.l.bf16 %v36
  %v69 = vunpack.c.l.bf16 %v37
  %v70 = vunpack.c.l.bf16 %v38
  %v71 = vunpack.c.l.bf16 %v39
  %v72 = vunpack.c.l.bf16 %v40
  %v73 = vunpack.c.l.bf16 %v41
  %v74 = vunpack.c.l.bf16 %v42
  %v75 = vunpack.c.l.bf16 %v43
  %v76 = vunpack.c.l.bf16 %v44
  %v77 = vunpack.c.l.bf16 %v45
  %v78 = vunpack.c.l.bf16 %v46
  %v79 = vld [vmem:[%s1] sm:$0xff]
  %v80 = vld [vmem:[%s1 + $0x8] sm:$0xff]
  %v81 = vld [vmem:[%s1 + $0x10] sm:$0xff]
  %v82 = vld [vmem:[%s1 + $0x18] sm:$0xff]
  %v83 = vld [vmem:[%s1 + $0x20] sm:$0xff]
  %v84 = vld [vmem:[%s1 + $0x28] sm:$0xff]
  %v85 = vld [vmem:[%s1 + $0x30] sm:$0xff]
  %v86 = vld [vmem:[%s1 + $0x38] sm:$0xff]
  %v87 = vld [vmem:[%s1 + $0x40] sm:$0xff]
  %v88 = vld [vmem:[%s1 + $0x48] sm:$0xff]
  %v89 = vld [vmem:[%s1 + $0x50] sm:$0xff]
  %v90 = vld [vmem:[%s1 + $0x58] sm:$0xff]
  %v91 = vld [vmem:[%s1 + $0x60] sm:$0xff]
  %v92 = vld [vmem:[%s1 + $0x68] sm:$0xff]
  %v93 = vld [vmem:[%s1 + $0x70] sm:$0xff]
  %v94 = vld [vmem:[%s1 + $0x78] sm:$0xff]
  %v95 = vld [vmem:[%s1 + $0x80] sm:$0xff]
  %v96 = vld [vmem:[%s1 + $0x88] sm:$0xff]
  %v97 = vld [vmem:[%s1 + $0x90] sm:$0xff]
  %v98 = vld [vmem:[%s1 + $0x98] sm:$0xff]
  %v99 = vld [vmem:[%s1 + $0xa0] sm:$0xff]
  %v100 = vld [vmem:[%s1 + $0xa8] sm:$0xff]
  %v101 = vld [vmem:[%s1 + $0xb0] sm:$0xff]
  %v102 = vld [vmem:[%s1 + $0xb8] sm:$0xff]
  %v103 = vld [vmem:[%s1 + $0xc0] sm:$0xff]
  %v104 = vld [vmem:[%s1 + $0xc8] sm:$0xff]
  %v105 = vld [vmem:[%s1 + $0xd0] sm:$0xff]
  %v106 = vld [vmem:[%s1 + $0xd8] sm:$0xff]
  %v107 = vld [vmem:[%s1 + $0xe0] sm:$0xff]
  %v108 = vld [vmem:[%s1 + $0xe8] sm:$0xff]
  %v109 = vld [vmem:[%s1 + $0xf0] sm:$0xff]
  %v110 = vld [vmem:[%s1 + $0xf8] sm:$0xff]
  %112 = vset.pattern.permute.xlu0 0
  %113 = vperm.xlu0 %112, %v79
  %v114 = vpop.permute.xlu0 %113
  %117 = vset.pattern.permute.xlu0 0
  %118 = vperm.xlu0 %117, %v80
  %v119 = vpop.permute.xlu0 %118
  %122 = vset.pattern.permute.xlu0 0
  %123 = vperm.xlu0 %122, %v81
  %v124 = vpop.permute.xlu0 %123
  %127 = vset.pattern.permute.xlu0 0
  %128 = vperm.xlu0 %127, %v82
  %v129 = vpop.permute.xlu0 %128
  %132 = vset.pattern.permute.xlu0 0
  %133 = vperm.xlu0 %132, %v83
  %v134 = vpop.permute.xlu0 %133
  %137 = vset.pattern.permute.xlu0 0
  %138 = vperm.xlu0 %137, %v84
  %v139 = vpop.permute.xlu0 %138
  %142 = vset.pattern.permute.xlu0 0
  %143 = vperm.xlu0 %142, %v85
  %v144 = vpop.permute.xlu0 %143
  %147 = vset.pattern.permute.xlu0 0
  %148 = vperm.xlu0 %147, %v86
  %v149 = vpop.permute.xlu0 %148
  %152 = vset.pattern.permute.xlu0 0
  %153 = vperm.xlu0 %152, %v87
  %v154 = vpop.permute.xlu0 %153
  %157 = vset.pattern.permute.xlu0 0
  %158 = vperm.xlu0 %157, %v88
  %v159 = vpop.permute.xlu0 %158
  %162 = vset.pattern.permute.xlu0 0
  %163 = vperm.xlu0 %162, %v89
  %v164 = vpop.permute.xlu0 %163
  %167 = vset.pattern.permute.xlu0 0
  %168 = vperm.xlu0 %167, %v90
  %v169 = vpop.permute.xlu0 %168
  %172 = vset.pattern.permute.xlu0 0
  %173 = vperm.xlu0 %172, %v91
  %v174 = vpop.permute.xlu0 %173
  %177 = vset.pattern.permute.xlu0 0
  %178 = vperm.xlu0 %177, %v92
  %v179 = vpop.permute.xlu0 %178
  %182 = vset.pattern.permute.xlu0 0
  %183 = vperm.xlu0 %182, %v93
  %v184 = vpop.permute.xlu0 %183
  %187 = vset.pattern.permute.xlu0 0
  %188 = vperm.xlu0 %187, %v94
  %v189 = vpop.permute.xlu0 %188
  %192 = vset.pattern.permute.xlu0 0
  %193 = vperm.xlu0 %192, %v95
  %v194 = vpop.permute.xlu0 %193
  %197 = vset.pattern.permute.xlu0 0
  %198 = vperm.xlu0 %197, %v96
  %v199 = vpop.permute.xlu0 %198
  %202 = vset.pattern.permute.xlu0 0
  %203 = vperm.xlu0 %202, %v97
  %v204 = vpop.permute.xlu0 %203
  %207 = vset.pattern.permute.xlu0 0
  %208 = vperm.xlu0 %207, %v98
  %v209 = vpop.permute.xlu0 %208
  %212 = vset.pattern.permute.xlu0 0
  %213 = vperm.xlu0 %212, %v99
  %v214 = vpop.permute.xlu0 %213
  %217 = vset.pattern.permute.xlu0 0
  %218 = vperm.xlu0 %217, %v100
  %v219 = vpop.permute.xlu0 %218
  %222 = vset.pattern.permute.xlu0 0
  %223 = vperm.xlu0 %222, %v101
  %v224 = vpop.permute.xlu0 %223
  %227 = vset.pattern.permute.xlu0 0
  %228 = vperm.xlu0 %227, %v102
  %v229 = vpop.permute.xlu0 %228
  %232 = vset.pattern.permute.xlu0 0
  %233 = vperm.xlu0 %232, %v103
  %v234 = vpop.permute.xlu0 %233
  %237 = vset.pattern.permute.xlu0 0
  %238 = vperm.xlu0 %237, %v104
  %v239 = vpop.permute.xlu0 %238
  %242 = vset.pattern.permute.xlu0 0
  %243 = vperm.xlu0 %242, %v105
  %v244 = vpop.permute.xlu0 %243
  %247 = vset.pattern.permute.xlu0 0
  %248 = vperm.xlu0 %247, %v106
  %v249 = vpop.permute.xlu0 %248
  %252 = vset.pattern.permute.xlu0 0
  %253 = vperm.xlu0 %252, %v107
  %v254 = vpop.permute.xlu0 %253
  %257 = vset.pattern.permute.xlu0 0
  %258 = vperm.xlu0 %257, %v108
  %v259 = vpop.permute.xlu0 %258
  %262 = vset.pattern.permute.xlu0 0
  %263 = vperm.xlu0 %262, %v109
  %v264 = vpop.permute.xlu0 %263
  %267 = vset.pattern.permute.xlu0 0
  %268 = vperm.xlu0 %267, %v110
  %v269 = vpop.permute.xlu0 %268
  %v271 = vmul.f32 %v47, %v114
  %v272 = vmul.f32 %v48, %v119
  %v273 = vmul.f32 %v49, %v124
  %v274 = vmul.f32 %v50, %v129
  %v275 = vmul.f32 %v51, %v134
  %v276 = vmul.f32 %v52, %v139
  %v277 = vmul.f32 %v53, %v144
  %v278 = vmul.f32 %v54, %v149
  %v279 = vmul.f32 %v55, %v154
  %v280 = vmul.f32 %v56, %v159
  %v281 = vmul.f32 %v57, %v164
  %v282 = vmul.f32 %v58, %v169
  %v283 = vmul.f32 %v59, %v174
  %v284 = vmul.f32 %v60, %v179
  %v285 = vmul.f32 %v61, %v184
  %v286 = vmul.f32 %v62, %v189
  %v287 = vmul.f32 %v63, %v194
  %v288 = vmul.f32 %v64, %v199
  %v289 = vmul.f32 %v65, %v204
  %v290 = vmul.f32 %v66, %v209
  %v291 = vmul.f32 %v67, %v214
  %v292 = vmul.f32 %v68, %v219
  %v293 = vmul.f32 %v69, %v224
  %v294 = vmul.f32 %v70, %v229
  %v295 = vmul.f32 %v71, %v234
  %v296 = vmul.f32 %v72, %v239
  %v297 = vmul.f32 %v73, %v244
  %v298 = vmul.f32 %v74, %v249
  %v299 = vmul.f32 %v75, %v254
  %v300 = vmul.f32 %v76, %v259
  %v301 = vmul.f32 %v77, %v264
  %v302 = vmul.f32 %v78, %v269
  %v303 = vpack.c.bf16 %v272, %v271
  %v304 = vpack.c.bf16 %v274, %v273
  %v305 = vpack.c.bf16 %v276, %v275
  %v306 = vpack.c.bf16 %v278, %v277
  %v307 = vpack.c.bf16 %v280, %v279
  %v308 = vpack.c.bf16 %v282, %v281
  %v309 = vpack.c.bf16 %v284, %v283
  %v310 = vpack.c.bf16 %v286, %v285
  %v311 = vpack.c.bf16 %v288, %v287
  %v312 = vpack.c.bf16 %v290, %v289
  %v313 = vpack.c.bf16 %v292, %v291
  %v314 = vpack.c.bf16 %v294, %v293
  %v315 = vpack.c.bf16 %v296, %v295
  %v316 = vpack.c.bf16 %v298, %v297
  %v317 = vpack.c.bf16 %v300, %v299
  %v318 = vpack.c.bf16 %v302, %v301
  %v319 = vld [vmem:[%s2] sm:$0xf]
  %v320 = vld [vmem:[%s2 + $0x4] sm:$0xf]
  %v321 = vld [vmem:[%s2 + $0x8] sm:$0xf]
  %v322 = vld [vmem:[%s2 + $0xc] sm:$0xf]
  %v323 = vld [vmem:[%s2 + $0x10] sm:$0xf]
  %v324 = vld [vmem:[%s2 + $0x14] sm:$0xf]
  %v325 = vld [vmem:[%s2 + $0x18] sm:$0xf]
  %v326 = vld [vmem:[%s2 + $0x1c] sm:$0xf]
  %v327 = vld [vmem:[%s2 + $0x20] sm:$0xf]
  %v328 = vld [vmem:[%s2 + $0x24] sm:$0xf]
  %v329 = vld [vmem:[%s2 + $0x28] sm:$0xf]
  %v330 = vld [vmem:[%s2 + $0x2c] sm:$0xf]
  %v331 = vld [vmem:[%s2 + $0x30] sm:$0xf]
  %v332 = vld [vmem:[%s2 + $0x34] sm:$0xf]
  %v333 = vld [vmem:[%s2 + $0x38] sm:$0xf]
  %v334 = vld [vmem:[%s2 + $0x3c] sm:$0xf]
  %v351 = vunpack.c.l.b16 %v319
  %v352 = vunpack.c.l.b16 %v320
  %v353 = vunpack.c.l.b16 %v321
  %v354 = vunpack.c.l.b16 %v322
  %v355 = vunpack.c.l.b16 %v323
  %v356 = vunpack.c.l.b16 %v324
  %v357 = vunpack.c.l.b16 %v325
  %v358 = vunpack.c.l.b16 %v326
  %v359 = vunpack.c.l.b16 %v327
  %v360 = vunpack.c.l.b16 %v328
  %v361 = vunpack.c.l.b16 %v329
  %v362 = vunpack.c.l.b16 %v330
  %v363 = vunpack.c.l.b16 %v331
  %v364 = vunpack.c.l.b16 %v332
  %v365 = vunpack.c.l.b16 %v333
  %v366 = vunpack.c.l.b16 %v334
  %v367 = vpack.c.b16 %v352, %v351
  %v368 = vpack.c.b16 %v354, %v353
  %v369 = vpack.c.b16 %v356, %v355
  %v370 = vpack.c.b16 %v358, %v357
  %v371 = vpack.c.b16 %v360, %v359
  %v372 = vpack.c.b16 %v362, %v361
  %v373 = vpack.c.b16 %v364, %v363
  %v374 = vpack.c.b16 %v366, %v365
  %383 = vmatprep.subr.bf16.mxu0 0
  %384 = vmatpush1.bf16.msra.mxu0 %v367
  %385 = vmatprep.subr.bf16.mxu0 0
  %386 = vmatpush1.bf16.msra.mxu0 %v368
  %387 = vmatprep.subr.bf16.mxu0 0
  %388 = vmatpush1.bf16.msra.mxu0 %v369
  %389 = vmatprep.subr.bf16.mxu0 0
  %390 = vmatpush1.bf16.msra.mxu0 %v370
  %391 = vmatprep.subr.bf16.mxu0 0
  %392 = vmatpush1.bf16.msra.mxu0 %v371
  %393 = vmatprep.subr.bf16.mxu0 0
  %394 = vmatpush1.bf16.msra.mxu0 %v372
  %395 = vmatprep.subr.bf16.mxu0 0
  %396 = vmatpush1.bf16.msra.mxu0 %v373
  %397 = vmatprep.subr.bf16.mxu0 0
  %398 = vmatpush1.bf16.msra.mxu0 %v374
  %399 = vmatprep.subr.bf16.mxu0 0
  %400 = vmatpush1.bf16.msra.mxu0 0
  %401 = vmatprep.subr.bf16.mxu0 0
  %402 = vmatpush1.bf16.msra.mxu0 0
  %403 = vmatprep.subr.bf16.mxu0 0
  %404 = vmatpush1.bf16.msra.mxu0 0
  %405 = vmatprep.subr.bf16.mxu0 0
  %406 = vmatpush1.bf16.msra.mxu0 0
  %407 = vmatprep.subr.bf16.mxu0 0
  %408 = vmatpush1.bf16.msra.mxu0 0
  %409 = vmatprep.subr.bf16.mxu0 0
  %410 = vmatpush1.bf16.msra.mxu0 0
  %411 = vmatprep.subr.bf16.mxu0 0
  %412 = vmatpush1.bf16.msra.mxu0 0
  %413 = vmatprep.subr.bf16.mxu0 0
  %414 = vmatpush1.bf16.msra.mxu0 0
  %415 = vmatprep.mubr.bf16.mxu0 0
  %416 = vmatmul.mubr.bf16.gmra.mrb[0].mxu0 %v303
  %v417 = vpop.f32.mrb[0].mxu0
  %v418 = vadd.f32 0.0, %v417
  %v419 = vpop.f32.mrb[0].mxu0
  %v420 = vpop.f32.mrb[0].mxu0
  %v421 = vadd.f32 0.0, %v420
  %v422 = vpop.f32.mrb[0].mxu0
  %423 = vmatprep.mubr.bf16.mxu0 0
  %424 = vmatmul.mubr.bf16.gmra.mrb[0].mxu0 %v304
  %v425 = vpop.f32.mrb[0].mxu0
  %v426 = vadd.f32 0.0, %v425
  %v427 = vpop.f32.mrb[0].mxu0
  %v428 = vpop.f32.mrb[0].mxu0
  %v429 = vadd.f32 0.0, %v428
  %v430 = vpop.f32.mrb[0].mxu0
  %431 = vmatprep.mubr.bf16.mxu0 0
  %432 = vmatmul.mubr.bf16.gmra.mrb[0].mxu0 %v305
  %v433 = vpop.f32.mrb[0].mxu0
  %v434 = vadd.f32 0.0, %v433
  %v435 = vpop.f32.mrb[0].mxu0
  %v436 = vpop.f32.mrb[0].mxu0
  %v437 = vadd.f32 0.0, %v436
  %v438 = vpop.f32.mrb[0].mxu0
  %439 = vmatprep.mubr.bf16.mxu0 0
  %440 = vmatmul.mubr.bf16.gmra.mrb[0].mxu0 %v306
  %v441 = vpop.f32.mrb[0].mxu0
  %v442 = vadd.f32 0.0, %v441
  %v443 = vpop.f32.mrb[0].mxu0
  %v444 = vpop.f32.mrb[0].mxu0
  %v445 = vadd.f32 0.0, %v444
  %v446 = vpop.f32.mrb[0].mxu0
  %447 = vmatprep.mubr.bf16.mxu0 0
  %448 = vmatmul.mubr.bf16.gmra.mrb[0].mxu0 %v307
  %v449 = vpop.f32.mrb[0].mxu0
  %v450 = vadd.f32 0.0, %v449
  %v451 = vpop.f32.mrb[0].mxu0
  %v452 = vpop.f32.mrb[0].mxu0
  %v453 = vadd.f32 0.0, %v452
  %v454 = vpop.f32.mrb[0].mxu0
  %455 = vmatprep.mubr.bf16.mxu0 0
  %456 = vmatmul.mubr.bf16.gmra.mrb[0].mxu0 %v308
  %v457 = vpop.f32.mrb[0].mxu0
  %v458 = vadd.f32 0.0, %v457
  %v459 = vpop.f32.mrb[0].mxu0
  %v460 = vpop.f32.mrb[0].mxu0
  %v461 = vadd.f32 0.0, %v460
  %v462 = vpop.f32.mrb[0].mxu0
  %463 = vmatprep.mubr.bf16.mxu0 0
  %464 = vmatmul.mubr.bf16.gmra.mrb[0].mxu0 %v309
  %v465 = vpop.f32.mrb[0].mxu0
  %v466 = vadd.f32 0.0, %v465
  %v467 = vpop.f32.mrb[0].mxu0
  %v468 = vpop.f32.mrb[0].mxu0
  %v469 = vadd.f32 0.0, %v468
  %v470 = vpop.f32.mrb[0].mxu0
  %471 = vmatprep.mubr.bf16.mxu0 0
  %472 = vmatmul.mubr.bf16.gmra.mrb[0].mxu0 %v310
  %v473 = vpop.f32.mrb[0].mxu0
  %v474 = vadd.f32 0.0, %v473
  %v475 = vpop.f32.mrb[0].mxu0
  %v476 = vpop.f32.mrb[0].mxu0
  %v477 = vadd.f32 0.0, %v476
  %v478 = vpop.f32.mrb[0].mxu0
  %479 = vmatprep.mubr.bf16.mxu0 0
  %480 = vmatmul.mubr.bf16.gmra.mrb[0].mxu0 %v311
  %v481 = vpop.f32.mrb[0].mxu0
  %v482 = vadd.f32 0.0, %v481
  %v483 = vpop.f32.mrb[0].mxu0
  %v484 = vpop.f32.mrb[0].mxu0
  %v485 = vadd.f32 0.0, %v484
  %v486 = vpop.f32.mrb[0].mxu0
  %487 = vmatprep.mubr.bf16.mxu0 0
  %488 = vmatmul.mubr.bf16.gmra.mrb[0].mxu0 %v312
  %v489 = vpop.f32.mrb[0].mxu0
  %v490 = vadd.f32 0.0, %v489
  %v491 = vpop.f32.mrb[0].mxu0
  %v492 = vpop.f32.mrb[0].mxu0
  %v493 = vadd.f32 0.0, %v492
  %v494 = vpop.f32.mrb[0].mxu0
  %495 = vmatprep.mubr.bf16.mxu0 0
  %496 = vmatmul.mubr.bf16.gmra.mrb[0].mxu0 %v313
  %v497 = vpop.f32.mrb[0].mxu0
  %v498 = vadd.f32 0.0, %v497
  %v499 = vpop.f32.mrb[0].mxu0
  %v500 = vpop.f32.mrb[0].mxu0
  %v501 = vadd.f32 0.0, %v500
  %v502 = vpop.f32.mrb[0].mxu0
  %503 = vmatprep.mubr.bf16.mxu0 0
  %504 = vmatmul.mubr.bf16.gmra.mrb[0].mxu0 %v314
  %v505 = vpop.f32.mrb[0].mxu0
  %v506 = vadd.f32 0.0, %v505
  %v507 = vpop.f32.mrb[0].mxu0
  %v508 = vpop.f32.mrb[0].mxu0
  %v509 = vadd.f32 0.0, %v508
  %v510 = vpop.f32.mrb[0].mxu0
  %511 = vmatprep.mubr.bf16.mxu0 0
  %512 = vmatmul.mubr.bf16.gmra.mrb[0].mxu0 %v315
  %v513 = vpop.f32.mrb[0].mxu0
  %v514 = vadd.f32 0.0, %v513
  %v515 = vpop.f32.mrb[0].mxu0
  %v516 = vpop.f32.mrb[0].mxu0
  %v517 = vadd.f32 0.0, %v516
  %v518 = vpop.f32.mrb[0].mxu0
  %519 = vmatprep.mubr.bf16.mxu0 0
  %520 = vmatmul.mubr.bf16.gmra.mrb[0].mxu0 %v316
  %v521 = vpop.f32.mrb[0].mxu0
  %v522 = vadd.f32 0.0, %v521
  %v523 = vpop.f32.mrb[0].mxu0
  %v524 = vpop.f32.mrb[0].mxu0
  %v525 = vadd.f32 0.0, %v524
  %v526 = vpop.f32.mrb[0].mxu0
  %527 = vmatprep.mubr.bf16.mxu0 0
  %528 = vmatmul.mubr.bf16.gmra.mrb[0].mxu0 %v317
  %v529 = vpop.f32.mrb[0].mxu0
  %v530 = vadd.f32 0.0, %v529
  %v531 = vpop.f32.mrb[0].mxu0
  %v532 = vpop.f32.mrb[0].mxu0
  %v533 = vadd.f32 0.0, %v532
  %v534 = vpop.f32.mrb[0].mxu0
  %535 = vmatprep.mubr.bf16.mxu0 0
  %536 = vmatmul.mubr.bf16.gmra.mrb[0].mxu0 %v318
  %v537 = vpop.f32.mrb[0].mxu0
  %v538 = vadd.f32 0.0, %v537
  %v539 = vpop.f32.mrb[0].mxu0
  %v540 = vpop.f32.mrb[0].mxu0
  %v541 = vadd.f32 0.0, %v540
  %v542 = vpop.f32.mrb[0].mxu0
  %543 = vdwg.mxu0
  %v544 = vpack.c.bf16 %v421, %v418
  %v545 = vpack.c.bf16 %v429, %v426
  %v546 = vpack.c.bf16 %v437, %v434
  %v547 = vpack.c.bf16 %v445, %v442
  %v548 = vpack.c.bf16 %v453, %v450
  %v549 = vpack.c.bf16 %v461, %v458
  %v550 = vpack.c.bf16 %v469, %v466
  %v551 = vpack.c.bf16 %v477, %v474
  %v552 = vpack.c.bf16 %v485, %v482
  %v553 = vpack.c.bf16 %v493, %v490
  %v554 = vpack.c.bf16 %v501, %v498
  %v555 = vpack.c.bf16 %v509, %v506
  %v556 = vpack.c.bf16 %v517, %v514
  %v557 = vpack.c.bf16 %v525, %v522
  %v558 = vpack.c.bf16 %v533, %v530
  %v559 = vpack.c.bf16 %v541, %v538
  %v576 = vunpack.c.l.b16 %v544
  %v577 = vunpack.c.h.b16 %v544
  %v578 = vunpack.c.l.b16 %v545
  %v579 = vunpack.c.h.b16 %v545
  %v580 = vunpack.c.l.b16 %v546
  %v581 = vunpack.c.h.b16 %v546
  %v582 = vunpack.c.l.b16 %v547
  %v583 = vunpack.c.h.b16 %v547
  %v584 = vunpack.c.l.b16 %v548
  %v585 = vunpack.c.h.b16 %v548
  %v586 = vunpack.c.l.b16 %v549
  %v587 = vunpack.c.h.b16 %v549
  %v588 = vunpack.c.l.b16 %v550
  %v589 = vunpack.c.h.b16 %v550
  %v590 = vunpack.c.l.b16 %v551
  %v591 = vunpack.c.h.b16 %v551
  %v592 = vunpack.c.l.b16 %v552
  %v593 = vunpack.c.h.b16 %v552
  %v594 = vunpack.c.l.b16 %v553
  %v595 = vunpack.c.h.b16 %v553
  %v596 = vunpack.c.l.b16 %v554
  %v597 = vunpack.c.h.b16 %v554
  %v598 = vunpack.c.l.b16 %v555
  %v599 = vunpack.c.h.b16 %v555
  %v600 = vunpack.c.l.b16 %v556
  %v601 = vunpack.c.h.b16 %v556
  %v602 = vunpack.c.l.b16 %v557
  %v603 = vunpack.c.h.b16 %v557
  %v604 = vunpack.c.l.b16 %v558
  %v605 = vunpack.c.h.b16 %v558
  %v606 = vunpack.c.l.b16 %v559
  %v607 = vunpack.c.h.b16 %v559
  %v608 = vpack.c.b16 %v576, %v576
  %v609 = vpack.c.b16 %v577, %v577
  %v610 = vpack.c.b16 %v578, %v578
  %v611 = vpack.c.b16 %v579, %v579
  %v612 = vpack.c.b16 %v580, %v580
  %v613 = vpack.c.b16 %v581, %v581
  %v614 = vpack.c.b16 %v582, %v582
  %v615 = vpack.c.b16 %v583, %v583
  %v616 = vpack.c.b16 %v584, %v584
  %v617 = vpack.c.b16 %v585, %v585
  %v618 = vpack.c.b16 %v586, %v586
  %v619 = vpack.c.b16 %v587, %v587
  %v620 = vpack.c.b16 %v588, %v588
  %v621 = vpack.c.b16 %v589, %v589
  %v622 = vpack.c.b16 %v590, %v590
  %v623 = vpack.c.b16 %v591, %v591
  %v624 = vpack.c.b16 %v592, %v592
  %v625 = vpack.c.b16 %v593, %v593
  %v626 = vpack.c.b16 %v594, %v594
  %v627 = vpack.c.b16 %v595, %v595
  %v628 = vpack.c.b16 %v596, %v596
  %v629 = vpack.c.b16 %v597, %v597
  %v630 = vpack.c.b16 %v598, %v598
  %v631 = vpack.c.b16 %v599, %v599
  %v632 = vpack.c.b16 %v600, %v600
  %v633 = vpack.c.b16 %v601, %v601
  %v634 = vpack.c.b16 %v602, %v602
  %v635 = vpack.c.b16 %v603, %v603
  %v636 = vpack.c.b16 %v604, %v604
  %v637 = vpack.c.b16 %v605, %v605
  %v638 = vpack.c.b16 %v606, %v606
  %v639 = vpack.c.b16 %v607, %v607
  %672 = vst [vmem:[%s3] sm:$0xf] %v608
  %673 = vst [vmem:[%s3 + $0x4] sm:$0xf] %v609
  %674 = vst [vmem:[%s3 + $0x8] sm:$0xf] %v610
  %675 = vst [vmem:[%s3 + $0xc] sm:$0xf] %v611
  %676 = vst [vmem:[%s3 + $0x10] sm:$0xf] %v612
  %677 = vst [vmem:[%s3 + $0x14] sm:$0xf] %v613
  %678 = vst [vmem:[%s3 + $0x18] sm:$0xf] %v614
  %679 = vst [vmem:[%s3 + $0x1c] sm:$0xf] %v615
  %680 = vst [vmem:[%s3 + $0x20] sm:$0xf] %v616
  %681 = vst [vmem:[%s3 + $0x24] sm:$0xf] %v617
  %682 = vst [vmem:[%s3 + $0x28] sm:$0xf] %v618
  %683 = vst [vmem:[%s3 + $0x2c] sm:$0xf] %v619
  %684 = vst [vmem:[%s3 + $0x30] sm:$0xf] %v620
  %685 = vst [vmem:[%s3 + $0x34] sm:$0xf] %v621
  %686 = vst [vmem:[%s3 + $0x38] sm:$0xf] %v622
  %687 = vst [vmem:[%s3 + $0x3c] sm:$0xf] %v623
  %688 = vst [vmem:[%s3 + $0x40] sm:$0xf] %v624
  %689 = vst [vmem:[%s3 + $0x44] sm:$0xf] %v625
  %690 = vst [vmem:[%s3 + $0x48] sm:$0xf] %v626
  %691 = vst [vmem:[%s3 + $0x4c] sm:$0xf] %v627
  %692 = vst [vmem:[%s3 + $0x50] sm:$0xf] %v628
  %693 = vst [vmem:[%s3 + $0x54] sm:$0xf] %v629
  %694 = vst [vmem:[%s3 + $0x58] sm:$0xf] %v630
  %695 = vst [vmem:[%s3 + $0x5c] sm:$0xf] %v631
  %696 = vst [vmem:[%s3 + $0x60] sm:$0xf] %v632
  %697 = vst [vmem:[%s3 + $0x64] sm:$0xf] %v633
  %698 = vst [vmem:[%s3 + $0x68] sm:$0xf] %v634
  %699 = vst [vmem:[%s3 + $0x6c] sm:$0xf] %v635
  %700 = vst [vmem:[%s3 + $0x70] sm:$0xf] %v636
  %701 = vst [vmem:[%s3 + $0x74] sm:$0xf] %v637
  %702 = vst [vmem:[%s3 + $0x78] sm:$0xf] %v638
  %703 = vst [vmem:[%s3 + $0x7c] sm:$0xf] %v639
  // Predicated region
  $region14: #{dense_gcn_forward.10} parent=0 // pred_check
    _
  $region15: #{dense_gcn_forward.10} parent=0 // pred_check_branch
    %705 = sbr.rel (0) target = $region17
  $region16: #{dense_gcn_forward.10} parent=0 // pred_region
    _
  $region17: #{dense_gcn_forward.10} parent=0 // pred_fallthru
    _
  // Predicated region
  $region18: #{dense_gcn_forward.10} parent=0 // pred_check
    _
  $region19: #{dense_gcn_forward.10} parent=0 // pred_check_branch
    %707 = sbr.rel (0) target = $region21
  $region20: #{dense_gcn_forward.10} parent=0 // pred_region
    _
  $region21: #{dense_gcn_forward.10} parent=0 // pred_fallthru
    _

</llo_original>
